<compile_context>
chip_gen: v7x
topology: tpu7x:2x2x1
jax: 0.10.0
libtpu: 0.0.40
codegen_flags: <defaults>
</compile_context>

<pallas_src>
import functools

import numpy as np
import jax
import jax.numpy as jnp
from jax import lax
from jax.experimental import pallas as pl
from jax.experimental.pallas import tpu as pltpu

BS0 = 128   # output-feature block size
BS1 = 128   # input-feature  block size
GROUP = 8   # sparse blocks processed per grid step


def spmm_linear_kernel(rows_ref, cols_ref, x_ref, w_ref, b_ref, o_ref, acc_ref,
                       *, group):
    """One grid step consumes `group` sparse weight blocks.

    rows_ref/cols_ref: SMEM int32 (nb_padded,) block coordinates.
    x_ref:   (n, in_features)   bf16, VMEM-resident for the whole grid.
    w_ref:   (group, BS1, BS0)  bf16, pre-transposed weight blocks.
    b_ref:   (1, out_features)  f32 bias.
    o_ref:   (n, out_features)  f32 output (written on the last grid step).
    acc_ref: (n, out_features)  f32 VMEM accumulator.
    """
    g = pl.program_id(0)

    @pl.when(g == 0)
    def _():
        acc_ref[...] = jnp.zeros_like(acc_ref)

    base = g * group

    def body(j, carry):
        row = rows_ref[base + j]
        col = cols_ref[base + j]
        x_slab = x_ref[:, pl.ds(pl.multiple_of(col * BS1, BS1), BS1)]
        partial = jnp.dot(x_slab, w_ref[j], preferred_element_type=jnp.float32)
        off = pl.multiple_of(row * BS0, BS0)
        acc_ref[:, pl.ds(off, BS0)] += partial
        return carry

    lax.fori_loop(0, group, body, 0, unroll=True)

    @pl.when(g == pl.num_programs(0) - 1)
    def _():
        o_ref[...] = (acc_ref[...] + b_ref[...]).astype(o_ref.dtype)


def spmm_linear(x, block_data, block_rows, block_cols, bias, out_features,
                group=GROUP):
    n, in_features = x.shape
    nb = block_data.shape[0]

    # Pad the block list to a multiple of `group` with all-zero blocks
    # (row=col=0); zero data contributes nothing to the accumulator.
    nb_pad = pl.cdiv(nb, group) * group
    pad = nb_pad - nb
    if pad:
        block_data = jnp.concatenate(
            [block_data, jnp.zeros((pad, BS0, BS1), block_data.dtype)], axis=0)
        block_rows = jnp.concatenate(
            [block_rows, jnp.zeros((pad,), jnp.int32)], axis=0)
        block_cols = jnp.concatenate(
            [block_cols, jnp.zeros((pad,), jnp.int32)], axis=0)
    n_groups = nb_pad // group

    # bf16 streaming (weights dominate HBM traffic), f32 accumulation in-kernel.
    x_bf16 = x.astype(jnp.bfloat16)
    # Pre-transpose each block to (BS1, BS0) so the kernel computes
    # x_slab (n, BS1) @ w_block_T (BS1, BS0) == x_slab @ W_block^T directly.
    w_t = jnp.swapaxes(block_data, 1, 2).astype(jnp.bfloat16)
    bias2d = bias.reshape(1, out_features).astype(jnp.float32)

    grid_spec = pltpu.PrefetchScalarGridSpec(
        num_scalar_prefetch=2,          # block_rows, block_cols live in SMEM
        grid=(n_groups,),
        in_specs=[
            # x: whole activation resident in VMEM (single DMA, never re-fetched)
            pl.BlockSpec((n, in_features), lambda g, rows, cols: (0, 0)),
            # weight blocks for group g
            pl.BlockSpec((group, BS1, BS0), lambda g, rows, cols: (g, 0, 0)),
            # bias: resident
            pl.BlockSpec((1, out_features), lambda g, rows, cols: (0, 0)),
        ],
        out_specs=pl.BlockSpec((n, out_features), lambda g, rows, cols: (0, 0)),
        scratch_shapes=[pltpu.VMEM((n, out_features), jnp.float32)],
    )
    kernel = functools.partial(spmm_linear_kernel, group=group)
    return pl.pallas_call(
        kernel,
        out_shape=jax.ShapeDtypeStruct((n, out_features), jnp.float32),
        grid_spec=grid_spec,
        compiler_params=pltpu.CompilerParams(
            dimension_semantics=("arbitrary",)),
    )(block_rows, block_cols, x_bf16, w_t, bias2d)


def make_block_sparse_weight(key, out_features, in_features, density):
    """Mimics BlockSparseMatrix.randn((out, in), block_count): random distinct
    block positions, randn block data.  No sorting / row-completion needed."""
    n_rb = out_features // BS0
    n_cb = in_features // BS1
    total = n_rb * n_cb
    block_count = max(1, int(density * total))
    k_pos, k_dat = jax.random.split(key)

    perm = np.asarray(jax.random.permutation(k_pos, total))[:block_count]
    rows = jnp.asarray((perm // n_cb).astype(np.int32))
    cols = jnp.asarray((perm % n_cb).astype(np.int32))
    data = jax.random.normal(k_dat, (block_count, BS0, BS1), dtype=jnp.float32)
    return data, rows, cols


def dense_weight(block_data, block_rows, block_cols, out_features, in_features):
    """Reference: materialize the dense (out_features, in_features) weight."""
    W = np.zeros((out_features, in_features), np.float32)
    d = np.asarray(block_data)
    r = np.asarray(block_rows)
    c = np.asarray(block_cols)
    for k in range(d.shape[0]):
        W[r[k] * BS0:(r[k] + 1) * BS0, c[k] * BS1:(c[k] + 1) * BS1] += d[k]
    return jnp.asarray(W)


if __name__ == "__main__":
    key = jax.random.PRNGKey(0)
    kx, kw, kb = jax.random.split(key, 3)

    in_features, out_features, density = 512, 768, 0.5
    batch = 8

    x = jax.random.normal(kx, (batch, in_features), dtype=jnp.float32)
    block_data, block_rows, block_cols = make_block_sparse_weight(
        kw, out_features, in_features, density)
    # Module default initializes bias to zeros; use a small random bias here so
    # the bias-add path in the kernel is actually exercised.
    bias = 0.1 * jax.random.normal(kb, (out_features,), dtype=jnp.float32)

    y = spmm_linear(x, block_data, block_rows, block_cols, bias, out_features)
    y = jax.block_until_ready(y)

    # Reference built from the same bf16-rounded operands the kernel consumes
    # (bf16*bf16 products are exact in f32; only accumulation order differs).
    x_r = x.astype(jnp.bfloat16).astype(jnp.float32)
    W_r = dense_weight(
        block_data.astype(jnp.bfloat16).astype(jnp.float32),
        block_rows, block_cols, out_features, in_features)
    y_ref = x_r @ W_r.T + bias

    assert y.shape == (batch, out_features)
    assert jnp.allclose(y, y_ref, atol=2e-3, rtol=2e-3), "mismatch vs dense reference"
    print("KERNEL_OK")
</pallas_src>

<mosaic_0001>
module attributes {stable_mosaic.version = 11 : i64} {
  func.func @spmm_linear_kernel(%arg0: i32, %arg1: memref<16xi32, #tpu.memory_space<smem>>, %arg2: memref<16xi32, #tpu.memory_space<smem>>, %arg3: memref<8x512xbf16, #tpu.memory_space<vmem>>, %arg4: memref<8x128x128xbf16, #tpu.memory_space<vmem>>, %arg5: memref<1x768xf32, #tpu.memory_space<vmem>>, %arg6: memref<8x768xf32, #tpu.memory_space<vmem>>, %arg7: memref<8x768xf32, #tpu.memory_space<vmem>>) attributes {dimension_semantics = [#tpu.dimension_semantics<arbitrary>], iteration_bounds = array<i64: 2>, scalar_prefetch = 2 : i64, scratch_operands = 1 : i64, tpu.core_type = #tpu.core_type<tc>, window_params = [{pipeline_mode = #tpu.pipeline_mode<synchronous>, transform_indices = @transform_0, window_bounds = array<i64: 8, 512>}, {transform_indices = @transform_1, window_bounds = array<i64: 8, 128, 128>}, {pipeline_mode = #tpu.pipeline_mode<synchronous>, transform_indices = @transform_2, window_bounds = array<i64: 1, 768>}, {pipeline_mode = #tpu.pipeline_mode<synchronous>, transform_indices = @transform_3, window_bounds = array<i64: 8, 768>}]} {
    %c0_i32 = arith.constant 0 : i32
    %0 = arith.cmpi eq, %arg0, %c0_i32 : i32
    %1 = arith.extui %0 : i1 to i32
    %c0_i32_0 = arith.constant 0 : i32
    %2 = arith.cmpi ne, %1, %c0_i32_0 : i32
    scf.if %2 {
      %cst_66 = arith.constant 0.000000e+00 : f32
      %175 = vector.broadcast %cst_66 : f32 to vector<8x768xf32>
      %c0_67 = arith.constant 0 : index
      %c0_68 = arith.constant 0 : index
      %176 = vector.load %arg7[%c0_67, %c0_68] : memref<8x768xf32, #tpu.memory_space<vmem>>, vector<8x768xf32>
      tpu.vector_store %arg7[%c0_67, %c0_68], %175 {strides = array<i32>} : memref<8x768xf32, #tpu.memory_space<vmem>>, vector<8x768xf32>,
    } else {
    }
    %c8_i32 = arith.constant 8 : i32
    %3 = arith.muli %arg0, %c8_i32 : i32
    %c0_i32_1 = arith.constant 0 : i32
    %4 = arith.addi %3, %c0_i32_1 : i32
    %5 = arith.index_cast %4 : i32 to index
    %6 = memref.load %arg1[%5] : memref<16xi32, #tpu.memory_space<smem>>
    %7 = arith.addi %3, %c0_i32_1 : i32
    %8 = arith.index_cast %7 : i32 to index
    %9 = memref.load %arg2[%8] : memref<16xi32, #tpu.memory_space<smem>>
    %c128_i32 = arith.constant 128 : i32
    %10 = arith.muli %9, %c128_i32 : i32
    %11 = tpu.assume_multiple %10, 128 : i32
    %c0 = arith.constant 0 : index
    %12 = arith.index_cast %11 : i32 to index
    %13 = vector.load %arg3[%c0, %12] : memref<8x512xbf16, #tpu.memory_space<vmem>>, vector<8x128xbf16>
    %14 = arith.index_cast %c0_i32_1 : i32 to index
    %c0_2 = arith.constant 0 : index
    %c0_3 = arith.constant 0 : index
    %15 = vector.load %arg4[%14, %c0_2, %c0_3] : memref<8x128x128xbf16, #tpu.memory_space<vmem>>, vector<1x128x128xbf16>
    %16 = vector.shape_cast %15 : vector<1x128x128xbf16> to vector<128x128xbf16>
    %cst = arith.constant dense<0.000000e+00> : vector<8x128xf32>
    %17 = tpu.matmul %13, %16, %cst {dimension_numbers = #tpu.dot_dimension_numbers<[1], [0], [0], [1], [0, 0, 1, 1], [], []>} : vector<8x128xbf16>, vector<128x128xbf16>, vector<8x128xf32> -> vector<8x128xf32>
    %c128_i32_4 = arith.constant 128 : i32
    %18 = arith.muli %6, %c128_i32_4 : i32
    %19 = tpu.assume_multiple %18, 128 : i32
    %c0_5 = arith.constant 0 : index
    %20 = arith.index_cast %19 : i32 to index
    %21 = vector.load %arg7[%c0_5, %20] : memref<8x768xf32, #tpu.memory_space<vmem>>, vector<8x128xf32>
    %22 = arith.addf %21, %17 : vector<8x128xf32>
    %c0_6 = arith.constant 0 : index
    %23 = arith.index_cast %19 : i32 to index
    %24 = vector.load %arg7[%c0_6, %23] : memref<8x768xf32, #tpu.memory_space<vmem>>, vector<8x128xf32>
    tpu.vector_store %arg7[%c0_6, %23], %22 {strides = array<i32>} : memref<8x768xf32, #tpu.memory_space<vmem>>, vector<8x128xf32>,
    %c1_i32 = arith.constant 1 : i32
    %25 = arith.addi %3, %c1_i32 : i32
    %26 = arith.index_cast %25 : i32 to index
    %27 = memref.load %arg1[%26] : memref<16xi32, #tpu.memory_space<smem>>
    %28 = arith.addi %3, %c1_i32 : i32
    %29 = arith.index_cast %28 : i32 to index
    %30 = memref.load %arg2[%29] : memref<16xi32, #tpu.memory_space<smem>>
    %c128_i32_7 = arith.constant 128 : i32
    %31 = arith.muli %30, %c128_i32_7 : i32
    %32 = tpu.assume_multiple %31, 128 : i32
    %c0_8 = arith.constant 0 : index
    %33 = arith.index_cast %32 : i32 to index
    %34 = vector.load %arg3[%c0_8, %33] : memref<8x512xbf16, #tpu.memory_space<vmem>>, vector<8x128xbf16>
    %35 = arith.index_cast %c1_i32 : i32 to index
    %c0_9 = arith.constant 0 : index
    %c0_10 = arith.constant 0 : index
    %36 = vector.load %arg4[%35, %c0_9, %c0_10] : memref<8x128x128xbf16, #tpu.memory_space<vmem>>, vector<1x128x128xbf16>
    %37 = vector.shape_cast %36 : vector<1x128x128xbf16> to vector<128x128xbf16>
    %cst_11 = arith.constant dense<0.000000e+00> : vector<8x128xf32>
    %38 = tpu.matmul %34, %37, %cst_11 {dimension_numbers = #tpu.dot_dimension_numbers<[1], [0], [0], [1], [0, 0, 1, 1], [], []>} : vector<8x128xbf16>, vector<128x128xbf16>, vector<8x128xf32> -> vector<8x128xf32>
    %c128_i32_12 = arith.constant 128 : i32
    %39 = arith.muli %27, %c128_i32_12 : i32
    %40 = tpu.assume_multiple %39, 128 : i32
    %c0_13 = arith.constant 0 : index
    %41 = arith.index_cast %40 : i32 to index
    %42 = vector.load %arg7[%c0_13, %41] : memref<8x768xf32, #tpu.memory_space<vmem>>, vector<8x128xf32>
    %43 = arith.addf %42, %38 : vector<8x128xf32>
    %c0_14 = arith.constant 0 : index
    %44 = arith.index_cast %40 : i32 to index
    %45 = vector.load %arg7[%c0_14, %44] : memref<8x768xf32, #tpu.memory_space<vmem>>, vector<8x128xf32>
    tpu.vector_store %arg7[%c0_14, %44], %43 {strides = array<i32>} : memref<8x768xf32, #tpu.memory_space<vmem>>, vector<8x128xf32>,
    %c2_i32 = arith.constant 2 : i32
    %46 = arith.addi %3, %c2_i32 : i32
    %47 = arith.index_cast %46 : i32 to index
    %48 = memref.load %arg1[%47] : memref<16xi32, #tpu.memory_space<smem>>
    %49 = arith.addi %3, %c2_i32 : i32
    %50 = arith.index_cast %49 : i32 to index
    %51 = memref.load %arg2[%50] : memref<16xi32, #tpu.memory_space<smem>>
    %c128_i32_15 = arith.constant 128 : i32
    %52 = arith.muli %51, %c128_i32_15 : i32
    %53 = tpu.assume_multiple %52, 128 : i32
    %c0_16 = arith.constant 0 : index
    %54 = arith.index_cast %53 : i32 to index
    %55 = vector.load %arg3[%c0_16, %54] : memref<8x512xbf16, #tpu.memory_space<vmem>>, vector<8x128xbf16>
    %56 = arith.index_cast %c2_i32 : i32 to index
    %c0_17 = arith.constant 0 : index
    %c0_18 = arith.constant 0 : index
    %57 = vector.load %arg4[%56, %c0_17, %c0_18] : memref<8x128x128xbf16, #tpu.memory_space<vmem>>, vector<1x128x128xbf16>
    %58 = vector.shape_cast %57 : vector<1x128x128xbf16> to vector<128x128xbf16>
    %cst_19 = arith.constant dense<0.000000e+00> : vector<8x128xf32>
    %59 = tpu.matmul %55, %58, %cst_19 {dimension_numbers = #tpu.dot_dimension_numbers<[1], [0], [0], [1], [0, 0, 1, 1], [], []>} : vector<8x128xbf16>, vector<128x128xbf16>, vector<8x128xf32> -> vector<8x128xf32>
    %c128_i32_20 = arith.constant 128 : i32
    %60 = arith.muli %48, %c128_i32_20 : i32
    %61 = tpu.assume_multiple %60, 128 : i32
    %c0_21 = arith.constant 0 : index
    %62 = arith.index_cast %61 : i32 to index
    %63 = vector.load %arg7[%c0_21, %62] : memref<8x768xf32, #tpu.memory_space<vmem>>, vector<8x128xf32>
    %64 = arith.addf %63, %59 : vector<8x128xf32>
    %c0_22 = arith.constant 0 : index
    %65 = arith.index_cast %61 : i32 to index
    %66 = vector.load %arg7[%c0_22, %65] : memref<8x768xf32, #tpu.memory_space<vmem>>, vector<8x128xf32>
    tpu.vector_store %arg7[%c0_22, %65], %64 {strides = array<i32>} : memref<8x768xf32, #tpu.memory_space<vmem>>, vector<8x128xf32>,
    %c3_i32 = arith.constant 3 : i32
    %67 = arith.addi %3, %c3_i32 : i32
    %68 = arith.index_cast %67 : i32 to index
    %69 = memref.load %arg1[%68] : memref<16xi32, #tpu.memory_space<smem>>
    %70 = arith.addi %3, %c3_i32 : i32
    %71 = arith.index_cast %70 : i32 to index
    %72 = memref.load %arg2[%71] : memref<16xi32, #tpu.memory_space<smem>>
    %c128_i32_23 = arith.constant 128 : i32
    %73 = arith.muli %72, %c128_i32_23 : i32
    %74 = tpu.assume_multiple %73, 128 : i32
    %c0_24 = arith.constant 0 : index
    %75 = arith.index_cast %74 : i32 to index
    %76 = vector.load %arg3[%c0_24, %75] : memref<8x512xbf16, #tpu.memory_space<vmem>>, vector<8x128xbf16>
    %77 = arith.index_cast %c3_i32 : i32 to index
    %c0_25 = arith.constant 0 : index
    %c0_26 = arith.constant 0 : index
    %78 = vector.load %arg4[%77, %c0_25, %c0_26] : memref<8x128x128xbf16, #tpu.memory_space<vmem>>, vector<1x128x128xbf16>
    %79 = vector.shape_cast %78 : vector<1x128x128xbf16> to vector<128x128xbf16>
    %cst_27 = arith.constant dense<0.000000e+00> : vector<8x128xf32>
    %80 = tpu.matmul %76, %79, %cst_27 {dimension_numbers = #tpu.dot_dimension_numbers<[1], [0], [0], [1], [0, 0, 1, 1], [], []>} : vector<8x128xbf16>, vector<128x128xbf16>, vector<8x128xf32> -> vector<8x128xf32>
    %c128_i32_28 = arith.constant 128 : i32
    %81 = arith.muli %69, %c128_i32_28 : i32
    %82 = tpu.assume_multiple %81, 128 : i32
    %c0_29 = arith.constant 0 : index
    %83 = arith.index_cast %82 : i32 to index
    %84 = vector.load %arg7[%c0_29, %83] : memref<8x768xf32, #tpu.memory_space<vmem>>, vector<8x128xf32>
    %85 = arith.addf %84, %80 : vector<8x128xf32>
    %c0_30 = arith.constant 0 : index
    %86 = arith.index_cast %82 : i32 to index
    %87 = vector.load %arg7[%c0_30, %86] : memref<8x768xf32, #tpu.memory_space<vmem>>, vector<8x128xf32>
    tpu.vector_store %arg7[%c0_30, %86], %85 {strides = array<i32>} : memref<8x768xf32, #tpu.memory_space<vmem>>, vector<8x128xf32>,
    %c4_i32 = arith.constant 4 : i32
    %88 = arith.addi %3, %c4_i32 : i32
    %89 = arith.index_cast %88 : i32 to index
    %90 = memref.load %arg1[%89] : memref<16xi32, #tpu.memory_space<smem>>
    %91 = arith.addi %3, %c4_i32 : i32
    %92 = arith.index_cast %91 : i32 to index
    %93 = memref.load %arg2[%92] : memref<16xi32, #tpu.memory_space<smem>>
    %c128_i32_31 = arith.constant 128 : i32
    %94 = arith.muli %93, %c128_i32_31 : i32
    %95 = tpu.assume_multiple %94, 128 : i32
    %c0_32 = arith.constant 0 : index
    %96 = arith.index_cast %95 : i32 to index
    %97 = vector.load %arg3[%c0_32, %96] : memref<8x512xbf16, #tpu.memory_space<vmem>>, vector<8x128xbf16>
    %98 = arith.index_cast %c4_i32 : i32 to index
    %c0_33 = arith.constant 0 : index
    %c0_34 = arith.constant 0 : index
    %99 = vector.load %arg4[%98, %c0_33, %c0_34] : memref<8x128x128xbf16, #tpu.memory_space<vmem>>, vector<1x128x128xbf16>
    %100 = vector.shape_cast %99 : vector<1x128x128xbf16> to vector<128x128xbf16>
    %cst_35 = arith.constant dense<0.000000e+00> : vector<8x128xf32>
    %101 = tpu.matmul %97, %100, %cst_35 {dimension_numbers = #tpu.dot_dimension_numbers<[1], [0], [0], [1], [0, 0, 1, 1], [], []>} : vector<8x128xbf16>, vector<128x128xbf16>, vector<8x128xf32> -> vector<8x128xf32>
    %c128_i32_36 = arith.constant 128 : i32
    %102 = arith.muli %90, %c128_i32_36 : i32
    %103 = tpu.assume_multiple %102, 128 : i32
    %c0_37 = arith.constant 0 : index
    %104 = arith.index_cast %103 : i32 to index
    %105 = vector.load %arg7[%c0_37, %104] : memref<8x768xf32, #tpu.memory_space<vmem>>, vector<8x128xf32>
    %106 = arith.addf %105, %101 : vector<8x128xf32>
    %c0_38 = arith.constant 0 : index
    %107 = arith.index_cast %103 : i32 to index
    %108 = vector.load %arg7[%c0_38, %107] : memref<8x768xf32, #tpu.memory_space<vmem>>, vector<8x128xf32>
    tpu.vector_store %arg7[%c0_38, %107], %106 {strides = array<i32>} : memref<8x768xf32, #tpu.memory_space<vmem>>, vector<8x128xf32>,
    %c5_i32 = arith.constant 5 : i32
    %109 = arith.addi %3, %c5_i32 : i32
    %110 = arith.index_cast %109 : i32 to index
    %111 = memref.load %arg1[%110] : memref<16xi32, #tpu.memory_space<smem>>
    %112 = arith.addi %3, %c5_i32 : i32
    %113 = arith.index_cast %112 : i32 to index
    %114 = memref.load %arg2[%113] : memref<16xi32, #tpu.memory_space<smem>>
    %c128_i32_39 = arith.constant 128 : i32
    %115 = arith.muli %114, %c128_i32_39 : i32
    %116 = tpu.assume_multiple %115, 128 : i32
    %c0_40 = arith.constant 0 : index
    %117 = arith.index_cast %116 : i32 to index
    %118 = vector.load %arg3[%c0_40, %117] : memref<8x512xbf16, #tpu.memory_space<vmem>>, vector<8x128xbf16>
    %119 = arith.index_cast %c5_i32 : i32 to index
    %c0_41 = arith.constant 0 : index
    %c0_42 = arith.constant 0 : index
    %120 = vector.load %arg4[%119, %c0_41, %c0_42] : memref<8x128x128xbf16, #tpu.memory_space<vmem>>, vector<1x128x128xbf16>
    %121 = vector.shape_cast %120 : vector<1x128x128xbf16> to vector<128x128xbf16>
    %cst_43 = arith.constant dense<0.000000e+00> : vector<8x128xf32>
    %122 = tpu.matmul %118, %121, %cst_43 {dimension_numbers = #tpu.dot_dimension_numbers<[1], [0], [0], [1], [0, 0, 1, 1], [], []>} : vector<8x128xbf16>, vector<128x128xbf16>, vector<8x128xf32> -> vector<8x128xf32>
    %c128_i32_44 = arith.constant 128 : i32
    %123 = arith.muli %111, %c128_i32_44 : i32
    %124 = tpu.assume_multiple %123, 128 : i32
    %c0_45 = arith.constant 0 : index
    %125 = arith.index_cast %124 : i32 to index
    %126 = vector.load %arg7[%c0_45, %125] : memref<8x768xf32, #tpu.memory_space<vmem>>, vector<8x128xf32>
    %127 = arith.addf %126, %122 : vector<8x128xf32>
    %c0_46 = arith.constant 0 : index
    %128 = arith.index_cast %124 : i32 to index
    %129 = vector.load %arg7[%c0_46, %128] : memref<8x768xf32, #tpu.memory_space<vmem>>, vector<8x128xf32>
    tpu.vector_store %arg7[%c0_46, %128], %127 {strides = array<i32>} : memref<8x768xf32, #tpu.memory_space<vmem>>, vector<8x128xf32>,
    %c6_i32 = arith.constant 6 : i32
    %130 = arith.addi %3, %c6_i32 : i32
    %131 = arith.index_cast %130 : i32 to index
    %132 = memref.load %arg1[%131] : memref<16xi32, #tpu.memory_space<smem>>
    %133 = arith.addi %3, %c6_i32 : i32
    %134 = arith.index_cast %133 : i32 to index
    %135 = memref.load %arg2[%134] : memref<16xi32, #tpu.memory_space<smem>>
    %c128_i32_47 = arith.constant 128 : i32
    %136 = arith.muli %135, %c128_i32_47 : i32
    %137 = tpu.assume_multiple %136, 128 : i32
    %c0_48 = arith.constant 0 : index
    %138 = arith.index_cast %137 : i32 to index
    %139 = vector.load %arg3[%c0_48, %138] : memref<8x512xbf16, #tpu.memory_space<vmem>>, vector<8x128xbf16>
    %140 = arith.index_cast %c6_i32 : i32 to index
    %c0_49 = arith.constant 0 : index
    %c0_50 = arith.constant 0 : index
    %141 = vector.load %arg4[%140, %c0_49, %c0_50] : memref<8x128x128xbf16, #tpu.memory_space<vmem>>, vector<1x128x128xbf16>
    %142 = vector.shape_cast %141 : vector<1x128x128xbf16> to vector<128x128xbf16>
    %cst_51 = arith.constant dense<0.000000e+00> : vector<8x128xf32>
    %143 = tpu.matmul %139, %142, %cst_51 {dimension_numbers = #tpu.dot_dimension_numbers<[1], [0], [0], [1], [0, 0, 1, 1], [], []>} : vector<8x128xbf16>, vector<128x128xbf16>, vector<8x128xf32> -> vector<8x128xf32>
    %c128_i32_52 = arith.constant 128 : i32
    %144 = arith.muli %132, %c128_i32_52 : i32
    %145 = tpu.assume_multiple %144, 128 : i32
    %c0_53 = arith.constant 0 : index
    %146 = arith.index_cast %145 : i32 to index
    %147 = vector.load %arg7[%c0_53, %146] : memref<8x768xf32, #tpu.memory_space<vmem>>, vector<8x128xf32>
    %148 = arith.addf %147, %143 : vector<8x128xf32>
    %c0_54 = arith.constant 0 : index
    %149 = arith.index_cast %145 : i32 to index
    %150 = vector.load %arg7[%c0_54, %149] : memref<8x768xf32, #tpu.memory_space<vmem>>, vector<8x128xf32>
    tpu.vector_store %arg7[%c0_54, %149], %148 {strides = array<i32>} : memref<8x768xf32, #tpu.memory_space<vmem>>, vector<8x128xf32>,
    %c7_i32 = arith.constant 7 : i32
    %151 = arith.addi %3, %c7_i32 : i32
    %152 = arith.index_cast %151 : i32 to index
    %153 = memref.load %arg1[%152] : memref<16xi32, #tpu.memory_space<smem>>
    %154 = arith.addi %3, %c7_i32 : i32
    %155 = arith.index_cast %154 : i32 to index
    %156 = memref.load %arg2[%155] : memref<16xi32, #tpu.memory_space<smem>>
    %c128_i32_55 = arith.constant 128 : i32
    %157 = arith.muli %156, %c128_i32_55 : i32
    %158 = tpu.assume_multiple %157, 128 : i32
    %c0_56 = arith.constant 0 : index
    %159 = arith.index_cast %158 : i32 to index
    %160 = vector.load %arg3[%c0_56, %159] : memref<8x512xbf16, #tpu.memory_space<vmem>>, vector<8x128xbf16>
    %161 = arith.index_cast %c7_i32 : i32 to index
    %c0_57 = arith.constant 0 : index
    %c0_58 = arith.constant 0 : index
    %162 = vector.load %arg4[%161, %c0_57, %c0_58] : memref<8x128x128xbf16, #tpu.memory_space<vmem>>, vector<1x128x128xbf16>
    %163 = vector.shape_cast %162 : vector<1x128x128xbf16> to vector<128x128xbf16>
    %cst_59 = arith.constant dense<0.000000e+00> : vector<8x128xf32>
    %164 = tpu.matmul %160, %163, %cst_59 {dimension_numbers = #tpu.dot_dimension_numbers<[1], [0], [0], [1], [0, 0, 1, 1], [], []>} : vector<8x128xbf16>, vector<128x128xbf16>, vector<8x128xf32> -> vector<8x128xf32>
    %c128_i32_60 = arith.constant 128 : i32
    %165 = arith.muli %153, %c128_i32_60 : i32
    %166 = tpu.assume_multiple %165, 128 : i32
    %c0_61 = arith.constant 0 : index
    %167 = arith.index_cast %166 : i32 to index
    %168 = vector.load %arg7[%c0_61, %167] : memref<8x768xf32, #tpu.memory_space<vmem>>, vector<8x128xf32>
    %169 = arith.addf %168, %164 : vector<8x128xf32>
    %c0_62 = arith.constant 0 : index
    %170 = arith.index_cast %166 : i32 to index
    %171 = vector.load %arg7[%c0_62, %170] : memref<8x768xf32, #tpu.memory_space<vmem>>, vector<8x128xf32>
    tpu.vector_store %arg7[%c0_62, %170], %169 {strides = array<i32>} : memref<8x768xf32, #tpu.memory_space<vmem>>, vector<8x128xf32>,
    %c8_i32_63 = arith.constant 8 : i32
    %c1_i32_64 = arith.constant 1 : i32
    %172 = arith.cmpi eq, %arg0, %c1_i32_64 : i32
    %173 = arith.extui %172 : i1 to i32
    %c0_i32_65 = arith.constant 0 : i32
    %174 = arith.cmpi ne, %173, %c0_i32_65 : i32
    scf.if %174 {
      %c0_66 = arith.constant 0 : index
      %c0_67 = arith.constant 0 : index
      %175 = vector.load %arg7[%c0_66, %c0_67] : memref<8x768xf32, #tpu.memory_space<vmem>>, vector<8x768xf32>
      %c0_68 = arith.constant 0 : index
      %c0_69 = arith.constant 0 : index
      %176 = vector.load %arg5[%c0_68, %c0_69] : memref<1x768xf32, #tpu.memory_space<vmem>>, vector<1x768xf32>
      %177 = vector.broadcast %176 : vector<1x768xf32> to vector<8x768xf32>
      %178 = arith.addf %175, %177 : vector<8x768xf32>
      %c0_70 = arith.constant 0 : index
      %c0_71 = arith.constant 0 : index
      %179 = vector.load %arg6[%c0_70, %c0_71] : memref<8x768xf32, #tpu.memory_space<vmem>>, vector<8x768xf32>
      tpu.vector_store %arg6[%c0_70, %c0_71], %178 {strides = array<i32>} : memref<8x768xf32, #tpu.memory_space<vmem>>, vector<8x768xf32>,
    } else {
    }
    return
  }
  func.func @transform_0(%arg0: i32, %arg1: memref<16xi32, #tpu.memory_space<smem>>, %arg2: memref<16xi32, #tpu.memory_space<smem>>) -> (i32, i32) {
    %c0_i32 = arith.constant 0 : i32
    %c0_i32_0 = arith.constant 0 : i32
    %c0_i32_1 = arith.constant 0 : i32
    return %c0_i32, %c0_i32_0 : i32, i32
  }
  func.func @transform_1(%arg0: i32, %arg1: memref<16xi32, #tpu.memory_space<smem>>, %arg2: memref<16xi32, #tpu.memory_space<smem>>) -> (i32, i32, i32) {
    %c0_i32 = arith.constant 0 : i32
    %c0_i32_0 = arith.constant 0 : i32
    %c0_i32_1 = arith.constant 0 : i32
    return %arg0, %c0_i32, %c0_i32_0 : i32, i32, i32
  }
  func.func @transform_2(%arg0: i32, %arg1: memref<16xi32, #tpu.memory_space<smem>>, %arg2: memref<16xi32, #tpu.memory_space<smem>>) -> (i32, i32) {
    %c0_i32 = arith.constant 0 : i32
    %c0_i32_0 = arith.constant 0 : i32
    %c0_i32_1 = arith.constant 0 : i32
    return %c0_i32, %c0_i32_0 : i32, i32
  }
  func.func @transform_3(%arg0: i32, %arg1: memref<16xi32, #tpu.memory_space<smem>>, %arg2: memref<16xi32, #tpu.memory_space<smem>>) -> (i32, i32) {
    %c0_i32 = arith.constant 0 : i32
    %c0_i32_0 = arith.constant 0 : i32
    %c0_i32_1 = arith.constant 0 : i32
    return %c0_i32, %c0_i32_0 : i32, i32
  }
}

</mosaic_0001>

<llo_original>
// kernel: tpu_custom_call.1
$region0: #{tpu_custom_call.1}
  #allocation0 [shape = 'u32[]', space=smem, size = 0x4, offset = 0x4, fixed_abs, tag = 'smem constant byte address 0x4 - core index']
  #allocation1 [shape = 'u32[144,128]{1,0:T(1,128)}', space=vmem, size = 0x12000, scoped, tag = 'internal scratch']
  #allocation2 [shape = 'f32[8,768]{1,0:T(8,128)}', space=vmem, size = 0x6000, scoped, tag = 'scratch operand']
  #allocation3 [shape = 's32[1]{0}', space=sflag, size = 0x4, scoped, tag = 'scoped memory for tpu_custom_call.1']
  #allocation4 [shape = 'u8[512]{0}', space=smem, size = 0x200, scoped, tag = 'prefetched SMEM operand 0']
  #allocation5 [shape = 'u8[512]{0}', space=smem, size = 0x200, scoped, tag = 'prefetched SMEM operand 1']
  %s0 = inlined_call_operand.hbm [shape: s32[16], index: 0, kind: input, shape index: {}]
  %s1 = inlined_call_operand.vmem [shape: s32[16], index: 1, kind: input, shape index: {}]
  %s2 = inlined_call_operand.hbm [shape: bf16[8,512], index: 2, kind: input, shape index: {}]
  %s3 = inlined_call_operand.hbm [shape: bf16[16,128,128], index: 3, kind: input, shape index: {}]
  %s4 = inlined_call_operand.vmem [shape: f32[1,768], index: 4, kind: input, shape index: {}]
  %s5 = inlined_call_operand.hbm [shape: f32[8,768], index: 5, kind: output, shape index: {}]
  %s6 = sld [smem:[#allocation0]]
  $region61: #{tpu_custom_call.1} parent=0
    _
  %s8 = ssub.s32 1, %s6
  %s9 = scalar_select 0, %s8, %s6
  %11 = dma.hbm_to_smem %s0, 16, [#allocation4], [#allocation3]
  %s12 = sshll.u32 %s1, 4
  %s13 = int_to_ptr.vmem [resolvable:$true] %s12
  %15 = dma.vmem_to_smem %s13, 16, [#allocation5], [#allocation3]
  %16 = dma.done [#allocation3], 32
  %17 = sfence
  $region1: #{tpu_custom_call.1} parent=0
    #allocation6 [shape = 'u8[8192]{0}', space=vmem, size = 0x2000, scoped, tag = 'input window, operand 2, single buffered']
    #allocation7 [shape = 's32[2]{0}', space=sflag, size = 0x8, scoped, tag = 'scoped memory for tpu_custom_call.1']
    #allocation8 [shape = 's32[2]{0}', space=sflag, size = 0x8, scoped, tag = 'scoped memory for tpu_custom_call.1']
    #allocation9 [shape = 'u8[524288]{0}', space=vmem, size = 0x80000, scoped, tag = 'input window, operand 3']
    #allocation10 [shape = 's32[2]{0}', space=sflag, size = 0x8, scoped, tag = 'scoped memory for tpu_custom_call.1']
    #allocation11 [shape = 'u8[24576]{0}', space=vmem, size = 0x6000, scoped, tag = 'output window, operand 0, single buffered']
    %18 = vsyncpa [#allocation7], 0
    %19 = vsyncpa [#allocation10], 0
    %s20 = scalar_lea.sflag [#allocation10], 1
    %21 = vsyncpa %s20, 0
    %22 = vsyncpa [#allocation8], 0
    loop: start=0, step=1, limit=4
    $region2: #{tpu_custom_call.1} parent=1 // loop_pre_header
      _
    $region3: #{tpu_custom_call.1} parent=1 // loop_header
      %s24 = sphi 0, %s28
      %p25 = scmp.ge.s32.totalorder %s24, 4
      %s32 = sphi 0, %s32
      %s34 = sphi 0, %s32
      %s35 = sphi 0, %s34
      %s49 = sphi 0, %s35
      %s55 = sphi 0, %s57
      %s58 = sphi 0, %s55
      %s59 = sphi 0, %s58
      %s75 = sphi 0, %s59
      %s79 = sphi 0, %s79
      %s81 = sphi 0, %s79
      %s82 = sphi 0, %s81
      %s96 = sphi 0, %s82
      %s100 = sphi 0, %s100
      %s102 = sphi 0, %s100
      %s103 = sphi 0, %s102
      %s117 = sphi 0, %s103
    $region4: #{tpu_custom_call.1} parent=1 // loop_header_branch
      %27 = sbr.rel (%p25) target = $region8
    $region5: #{tpu_custom_call.1} parent=1 // loop_body
      %s29 = ssub.s32 %s24, 1
      %s30 = ssub.s32 %s24, 2
      %s31 = sadd.s32 %s24, 1
      %s33 = sadd.s32 %s32, 1
      %p36 = scmp.eq.s32.totalorder %s24, 1
      %p37 = scmp.ne.s32.totalorder %s32, %s34
      %p38 = scmp.eq.s32.totalorder %s24, 0
      %p39 = por %p37, %p38
      %p40 = scmp.ne.s32.totalorder %s32, %s34
      %p41 = scmp.eq.s32.totalorder %s29, 1
      %p42 = por %p40, %p41
      %p43 = scmp.ne.s32.totalorder %s34, %s35
      %p44 = scmp.eq.s32.totalorder %s29, 0
      %p45 = por %p43, %p44
      %p46 = scmp.ne.s32.totalorder %s34, %s35
      %p47 = scmp.eq.s32.totalorder %s30, 1
      %p48 = por %p46, %p47
      %p50 = scmp.ne.s32.totalorder %s35, %s49
      %p51 = scmp.eq.s32.totalorder %s30, 0
      %p52 = por %p50, %p51
      %s53 = ssub.s32 %s24, %s31
      %p54 = scmp.eq.s32.totalorder %s53, 0
      %s56 = sadd.s32 %s55, 1
      %s57 = scalar_select %p54, %s55, %s56
      %p60 = pneg %p54
      %p61 = scmp.eq.s32.totalorder %s24, 1
      %p62 = por %p60, %p61
      %p63 = scmp.ne.s32.totalorder %s55, %s58
      %p64 = scmp.eq.s32.totalorder %s24, 0
      %p65 = por %p63, %p64
      %p66 = scmp.ne.s32.totalorder %s55, %s58
      %p67 = scmp.eq.s32.totalorder %s29, 1
      %p68 = por %p66, %p67
      %p69 = scmp.ne.s32.totalorder %s58, %s59
      %p70 = scmp.eq.s32.totalorder %s29, 0
      %p71 = por %p69, %p70
      %p72 = scmp.ne.s32.totalorder %s58, %s59
      %p73 = scmp.eq.s32.totalorder %s30, 1
      %p74 = por %p72, %p73
      %p76 = scmp.ne.s32.totalorder %s59, %s75
      %p77 = scmp.eq.s32.totalorder %s30, 0
      %p78 = por %p76, %p77
      %s80 = sadd.s32 %s79, 1
      %p83 = scmp.eq.s32.totalorder %s24, 1
      %p84 = scmp.ne.s32.totalorder %s79, %s81
      %p85 = scmp.eq.s32.totalorder %s24, 0
      %p86 = por %p84, %p85
      %p87 = scmp.ne.s32.totalorder %s79, %s81
      %p88 = scmp.eq.s32.totalorder %s29, 1
      %p89 = por %p87, %p88
      %p90 = scmp.ne.s32.totalorder %s81, %s82
      %p91 = scmp.eq.s32.totalorder %s29, 0
      %p92 = por %p90, %p91
      %p93 = scmp.ne.s32.totalorder %s81, %s82
      %p94 = scmp.eq.s32.totalorder %s30, 1
      %p95 = por %p93, %p94
      %p97 = scmp.ne.s32.totalorder %s82, %s96
      %p98 = scmp.eq.s32.totalorder %s30, 0
      %p99 = por %p97, %p98
      %s101 = sadd.s32 %s100, 1
      %p104 = scmp.eq.s32.totalorder %s24, 1
      %p105 = scmp.ne.s32.totalorder %s100, %s102
      %p106 = scmp.eq.s32.totalorder %s24, 0
      %p107 = por %p105, %p106
      %p108 = scmp.ne.s32.totalorder %s100, %s102
      %p109 = scmp.eq.s32.totalorder %s29, 1
      %p110 = por %p108, %p109
      %p111 = scmp.ne.s32.totalorder %s102, %s103
      %p112 = scmp.eq.s32.totalorder %s29, 0
      %p113 = por %p111, %p112
      %p114 = scmp.ne.s32.totalorder %s102, %s103
      %p115 = scmp.eq.s32.totalorder %s30, 1
      %p116 = por %p114, %p115
      %p118 = scmp.ne.s32.totalorder %s103, %s117
      %p119 = scmp.eq.s32.totalorder %s30, 0
      %p120 = por %p118, %p119
      %p121 = scmp.le.s32.totalorder 1, %s24
      %p122 = scmp.lt.s32.totalorder %s24, 3
      %p123 = pnand %p121, %p122
      %p124 = pneg %p123
      // Predicated region
      $region9: #{tpu_custom_call.1} parent=5 // pred_check
        _
      $region10: #{tpu_custom_call.1} parent=5 // pred_check_branch
        %126 = sbr.rel (%p123) target = $region12
      $region11: #{tpu_custom_call.1} parent=5 // pred_region
        %s127 = ssub.s32 %s24, 1
        // Predicated region
        $region13: #{tpu_custom_call.1} parent=11 // pred_check
          %p128 = pneg %p45
        $region14: #{tpu_custom_call.1} parent=11 // pred_check_branch
          %130 = sbr.rel (%p128) target = $region16
        $region15: #{tpu_custom_call.1} parent=11 // pred_region
          %s132 = ssub.s32 256, 256
          %133 = vsyncadd [#allocation7], %s132
          %s135 = sshll.u32 [#allocation6], 4
          %s136 = int_to_ptr.vmem [resolvable:$true] %s135
          %138 = dma.hbm_to_vmem [thread:$0]  %s2, 256, %s136, [#allocation7]
        $region16: #{tpu_custom_call.1} parent=11 // pred_fallthru
          _
        // Predicated region
        $region17: #{tpu_custom_call.1} parent=11 // pred_check
          %p139 = pneg %p92
        $region18: #{tpu_custom_call.1} parent=11 // pred_check_branch
          %141 = sbr.rel (%p139) target = $region20
        $region19: #{tpu_custom_call.1} parent=11 // pred_region
          _
        $region20: #{tpu_custom_call.1} parent=11 // pred_fallthru
          _
      $region12: #{tpu_custom_call.1} parent=5 // pred_fallthru
        _
      %p142 = scmp.lt.s32.totalorder %s24, 2
      // Predicated region
      $region21: #{tpu_custom_call.1} parent=5 // pred_check
        %p143 = pneg %p142
      $region22: #{tpu_custom_call.1} parent=5 // pred_check_branch
        %145 = sbr.rel (%p143) target = $region24
      $region23: #{tpu_custom_call.1} parent=5 // pred_region
        // Predicated region
        $region25: #{tpu_custom_call.1} parent=23 // pred_check
          %p146 = pneg %p65
        $region26: #{tpu_custom_call.1} parent=23 // pred_check_branch
          %148 = sbr.rel (%p146) target = $region28
        $region27: #{tpu_custom_call.1} parent=23 // pred_region
          %s149 = sand.u32 %s55, 1
          %s150 = scalar_lea.sflag [#allocation10], %s149
          %s151 = sand.u32 %s55, 1
          %s152 = smul.addr %s151, 512
          %s153 = scalar_lea.vmem [#allocation9], %s152
          %s154 = smul.u32 8, %s24
          %s156 = ssub.s32 8192, 8192
          %157 = vsyncadd %s150, %s156
          %s158 = smul.addr %s154, 16
          %s159 = smul.addr %s158, 64
          %s160 = scalar_lea.hbm %s3, %s159
          %s161 = sshll.u32 %s153, 4
          %s162 = int_to_ptr.vmem [resolvable:$true] %s161
          %167 = dma.hbm_to_vmem [thread:$0]  %s160, 8192, %s162, %s150, 64, 64, 4
        $region28: #{tpu_custom_call.1} parent=23 // pred_fallthru
          _
      $region24: #{tpu_custom_call.1} parent=5 // pred_fallthru
        _
      %p168 = scmp.le.s32.totalorder 1, %s24
      %p169 = scmp.lt.s32.totalorder %s24, 3
      %p170 = pnand %p168, %p169
      %p171 = pneg %p170
      // Predicated region
      $region29: #{tpu_custom_call.1} parent=5 // pred_check
        _
      $region30: #{tpu_custom_call.1} parent=5 // pred_check_branch
        %173 = sbr.rel (%p170) target = $region32
      $region31: #{tpu_custom_call.1} parent=5 // pred_region
        %s174 = ssub.s32 %s24, 1
        // Predicated region
        $region33: #{tpu_custom_call.1} parent=31 // pred_check
          %p175 = pneg %p45
        $region34: #{tpu_custom_call.1} parent=31 // pred_check_branch
          %177 = sbr.rel (%p175) target = $region36
        $region35: #{tpu_custom_call.1} parent=31 // pred_region
          %178 = dma.done [#allocation7], 256
        $region36: #{tpu_custom_call.1} parent=31 // pred_fallthru
          _
        %s179 = sand.u32 %s58, 1
        %s180 = scalar_lea.sflag [#allocation10], %s179
        %s181 = sand.u32 %s58, 1
        %s182 = smul.addr %s181, 512
        %s183 = scalar_lea.vmem [#allocation9], %s182
        // Predicated region
        $region37: #{tpu_custom_call.1} parent=31 // pred_check
          %p184 = pneg %p71
        $region38: #{tpu_custom_call.1} parent=31 // pred_check_branch
          %186 = sbr.rel (%p184) target = $region40
        $region39: #{tpu_custom_call.1} parent=31 // pred_region
          %187 = dma.done %s180, 8192
        $region40: #{tpu_custom_call.1} parent=31 // pred_fallthru
          _
        %p188 = pneg %p45
        %p189 = pneg %p42
        %s190 = sand.u32 %s58, 1
        %s191 = scalar_lea.sflag [#allocation10], %s190
        %s192 = sand.u32 %s58, 1
        %s193 = smul.addr %s192, 512
        %s194 = scalar_lea.vmem [#allocation9], %s193
        %p195 = pneg %p71
        %p196 = pneg %p68
        %p197 = pneg %p92
        %p198 = pneg %p89
        %p199 = pneg %p113
        %p200 = pneg %p110
        %s201 = smul.u32 8, %s29
        %p203 = scmp.eq.s32.totalorder %s29, 0
        // Predicated region
        $region41: #{tpu_custom_call.1} parent=31 // pred_check
          %p204 = pneg %p203
        $region42: #{tpu_custom_call.1} parent=31 // pred_check_branch
          %206 = sbr.rel (%p204) target = $region44
        $region43: #{tpu_custom_call.1} parent=31 // pred_region
          %207 = vst [vmem:[#allocation2] sm:$0xff] 0.0
          %208 = vst [vmem:[#allocation2 + $0x8] sm:$0xff] 0.0
          %209 = vst [vmem:[#allocation2 + $0x10] sm:$0xff] 0.0
          %210 = vst [vmem:[#allocation2 + $0x18] sm:$0xff] 0.0
          %211 = vst [vmem:[#allocation2 + $0x20] sm:$0xff] 0.0
          %212 = vst [vmem:[#allocation2 + $0x28] sm:$0xff] 0.0
        $region44: #{tpu_custom_call.1} parent=31 // pred_fallthru
          _
        %s213 = smul.u32 %s29, 8
        %s214 = sld [smem:[#allocation4 + %s213]]
        %s215 = sld [smem:[#allocation5 + %s213]]
        %s216 = smul.u32 %s215, 128
        %s217 = sshra.s32 %s216, 7
        %s218 = sand.u32 %s216, 127
        %s219 = smul.addr %s217, 4
        %s220 = scalar_lea.vmem [#allocation6], %s219
        %v221 = vld [vmem:[%s220] sm:$0xf]
        %v222 = vld [vmem:[%s183] sm:$0xf]
        %v223 = vld [vmem:[%s183 + $0x4] sm:$0xf]
        %v224 = vld [vmem:[%s183 + $0x8] sm:$0xf]
        %v225 = vld [vmem:[%s183 + $0xc] sm:$0xf]
        %v226 = vld [vmem:[%s183 + $0x10] sm:$0xf]
        %v227 = vld [vmem:[%s183 + $0x14] sm:$0xf]
        %v228 = vld [vmem:[%s183 + $0x18] sm:$0xf]
        %v229 = vld [vmem:[%s183 + $0x1c] sm:$0xf]
        %v230 = vld [vmem:[%s183 + $0x20] sm:$0xf]
        %v231 = vld [vmem:[%s183 + $0x24] sm:$0xf]
        %v232 = vld [vmem:[%s183 + $0x28] sm:$0xf]
        %v233 = vld [vmem:[%s183 + $0x2c] sm:$0xf]
        %v234 = vld [vmem:[%s183 + $0x30] sm:$0xf]
        %v235 = vld [vmem:[%s183 + $0x34] sm:$0xf]
        %v236 = vld [vmem:[%s183 + $0x38] sm:$0xf]
        %v237 = vld [vmem:[%s183 + $0x3c] sm:$0xf]
        %v254 = vunpack.c.l.b16 %v222
        %v255 = vunpack.c.l.b16 %v223
        %v256 = vunpack.c.l.b16 %v224
        %v257 = vunpack.c.l.b16 %v225
        %v258 = vunpack.c.l.b16 %v226
        %v259 = vunpack.c.l.b16 %v227
        %v260 = vunpack.c.l.b16 %v228
        %v261 = vunpack.c.l.b16 %v229
        %v262 = vunpack.c.l.b16 %v230
        %v263 = vunpack.c.l.b16 %v231
        %v264 = vunpack.c.l.b16 %v232
        %v265 = vunpack.c.l.b16 %v233
        %v266 = vunpack.c.l.b16 %v234
        %v267 = vunpack.c.l.b16 %v235
        %v268 = vunpack.c.l.b16 %v236
        %v269 = vunpack.c.l.b16 %v237
        %v270 = vpack.c.b16 %v255, %v254
        %v271 = vpack.c.b16 %v257, %v256
        %v272 = vpack.c.b16 %v259, %v258
        %v273 = vpack.c.b16 %v261, %v260
        %v274 = vpack.c.b16 %v263, %v262
        %v275 = vpack.c.b16 %v265, %v264
        %v276 = vpack.c.b16 %v267, %v266
        %v277 = vpack.c.b16 %v269, %v268
        %286 = vmatprep.subr.bf16.mxu0 0
        %287 = vmatpush1.bf16.msra.mxu0 %v270
        %288 = vmatprep.subr.bf16.mxu0 0
        %289 = vmatpush1.bf16.msra.mxu0 %v271
        %290 = vmatprep.subr.bf16.mxu0 0
        %291 = vmatpush1.bf16.msra.mxu0 %v272
        %292 = vmatprep.subr.bf16.mxu0 0
        %293 = vmatpush1.bf16.msra.mxu0 %v273
        %294 = vmatprep.subr.bf16.mxu0 0
        %295 = vmatpush1.bf16.msra.mxu0 %v274
        %296 = vmatprep.subr.bf16.mxu0 0
        %297 = vmatpush1.bf16.msra.mxu0 %v275
        %298 = vmatprep.subr.bf16.mxu0 0
        %299 = vmatpush1.bf16.msra.mxu0 %v276
        %300 = vmatprep.subr.bf16.mxu0 0
        %301 = vmatpush1.bf16.msra.mxu0 %v277
        %302 = vmatprep.subr.bf16.mxu0 0
        %303 = vmatpush1.bf16.msra.mxu0 0
        %304 = vmatprep.subr.bf16.mxu0 0
        %305 = vmatpush1.bf16.msra.mxu0 0
        %306 = vmatprep.subr.bf16.mxu0 0
        %307 = vmatpush1.bf16.msra.mxu0 0
        %308 = vmatprep.subr.bf16.mxu0 0
        %309 = vmatpush1.bf16.msra.mxu0 0
        %310 = vmatprep.subr.bf16.mxu0 0
        %311 = vmatpush1.bf16.msra.mxu0 0
        %312 = vmatprep.subr.bf16.mxu0 0
        %313 = vmatpush1.bf16.msra.mxu0 0
        %314 = vmatprep.subr.bf16.mxu0 0
        %315 = vmatpush1.bf16.msra.mxu0 0
        %316 = vmatprep.subr.bf16.mxu0 0
        %317 = vmatpush1.bf16.msra.mxu0 0
        %318 = vmatprep.mubr.bf16.mxu0 0
        %319 = vmatmul.mubr.bf16.gmra.mrb[0].mxu0 %v221
        %v320 = vpop.f32.mrb[0].mxu0
        %v321 = vadd.f32 0.0, %v320
        %v322 = vpop.f32.mrb[0].mxu0
        %v323 = vpop.f32.mrb[0].mxu0
        %v324 = vpop.f32.mrb[0].mxu0
        %325 = vdwg.mxu0
        %s326 = smul.u32 %s214, 128
        %s327 = sshra.s32 %s326, 7
        %s328 = sand.u32 %s326, 127
        %s329 = smul.addr %s327, 8
        %s330 = scalar_lea.vmem [#allocation2], %s329
        %v331 = vld [vmem:[%s330] sm:$0xff]
        %v332 = vadd.f32 %v331, %v321
        %333 = vst [vmem:[%s330] sm:$0xff] %v332
        %s334 = sadd.s32 %s213, 1
        %s335 = sld [smem:[#allocation4 + %s334]]
        %s336 = sld [smem:[#allocation5 + %s334]]
        %s337 = smul.u32 %s336, 128
        %s338 = sshra.s32 %s337, 7
        %s339 = sand.u32 %s337, 127
        %s340 = smul.addr %s338, 4
        %s341 = scalar_lea.vmem [#allocation6], %s340
        %v342 = vld [vmem:[%s341] sm:$0xf]
        %s343 = scalar_lea.vmem %s183, 64 [#allocation9]
        %v344 = vld [vmem:[%s343] sm:$0xf]
        %v345 = vld [vmem:[%s343 + $0x4] sm:$0xf]
        %v346 = vld [vmem:[%s343 + $0x8] sm:$0xf]
        %v347 = vld [vmem:[%s343 + $0xc] sm:$0xf]
        %v348 = vld [vmem:[%s343 + $0x10] sm:$0xf]
        %v349 = vld [vmem:[%s343 + $0x14] sm:$0xf]
        %v350 = vld [vmem:[%s343 + $0x18] sm:$0xf]
        %v351 = vld [vmem:[%s343 + $0x1c] sm:$0xf]
        %v352 = vld [vmem:[%s343 + $0x20] sm:$0xf]
        %v353 = vld [vmem:[%s343 + $0x24] sm:$0xf]
        %v354 = vld [vmem:[%s343 + $0x28] sm:$0xf]
        %v355 = vld [vmem:[%s343 + $0x2c] sm:$0xf]
        %v356 = vld [vmem:[%s343 + $0x30] sm:$0xf]
        %v357 = vld [vmem:[%s343 + $0x34] sm:$0xf]
        %v358 = vld [vmem:[%s343 + $0x38] sm:$0xf]
        %v359 = vld [vmem:[%s343 + $0x3c] sm:$0xf]
        %v376 = vunpack.c.l.b16 %v344
        %v377 = vunpack.c.l.b16 %v345
        %v378 = vunpack.c.l.b16 %v346
        %v379 = vunpack.c.l.b16 %v347
        %v380 = vunpack.c.l.b16 %v348
        %v381 = vunpack.c.l.b16 %v349
        %v382 = vunpack.c.l.b16 %v350
        %v383 = vunpack.c.l.b16 %v351
        %v384 = vunpack.c.l.b16 %v352
        %v385 = vunpack.c.l.b16 %v353
        %v386 = vunpack.c.l.b16 %v354
        %v387 = vunpack.c.l.b16 %v355
        %v388 = vunpack.c.l.b16 %v356
        %v389 = vunpack.c.l.b16 %v357
        %v390 = vunpack.c.l.b16 %v358
        %v391 = vunpack.c.l.b16 %v359
        %v392 = vpack.c.b16 %v377, %v376
        %v393 = vpack.c.b16 %v379, %v378
        %v394 = vpack.c.b16 %v381, %v380
        %v395 = vpack.c.b16 %v383, %v382
        %v396 = vpack.c.b16 %v385, %v384
        %v397 = vpack.c.b16 %v387, %v386
        %v398 = vpack.c.b16 %v389, %v388
        %v399 = vpack.c.b16 %v391, %v390
        %408 = vmatprep.subr.bf16.mxu0 0
        %409 = vmatpush1.bf16.msra.mxu0 %v392
        %410 = vmatprep.subr.bf16.mxu0 0
        %411 = vmatpush1.bf16.msra.mxu0 %v393
        %412 = vmatprep.subr.bf16.mxu0 0
        %413 = vmatpush1.bf16.msra.mxu0 %v394
        %414 = vmatprep.subr.bf16.mxu0 0
        %415 = vmatpush1.bf16.msra.mxu0 %v395
        %416 = vmatprep.subr.bf16.mxu0 0
        %417 = vmatpush1.bf16.msra.mxu0 %v396
        %418 = vmatprep.subr.bf16.mxu0 0
        %419 = vmatpush1.bf16.msra.mxu0 %v397
        %420 = vmatprep.subr.bf16.mxu0 0
        %421 = vmatpush1.bf16.msra.mxu0 %v398
        %422 = vmatprep.subr.bf16.mxu0 0
        %423 = vmatpush1.bf16.msra.mxu0 %v399
        %424 = vmatprep.subr.bf16.mxu0 0
        %425 = vmatpush1.bf16.msra.mxu0 0
        %426 = vmatprep.subr.bf16.mxu0 0
        %427 = vmatpush1.bf16.msra.mxu0 0
        %428 = vmatprep.subr.bf16.mxu0 0
        %429 = vmatpush1.bf16.msra.mxu0 0
        %430 = vmatprep.subr.bf16.mxu0 0
        %431 = vmatpush1.bf16.msra.mxu0 0
        %432 = vmatprep.subr.bf16.mxu0 0
        %433 = vmatpush1.bf16.msra.mxu0 0
        %434 = vmatprep.subr.bf16.mxu0 0
        %435 = vmatpush1.bf16.msra.mxu0 0
        %436 = vmatprep.subr.bf16.mxu0 0
        %437 = vmatpush1.bf16.msra.mxu0 0
        %438 = vmatprep.subr.bf16.mxu0 0
        %439 = vmatpush1.bf16.msra.mxu0 0
        %440 = vmatprep.mubr.bf16.mxu0 0
        %441 = vmatmul.mubr.bf16.gmra.mrb[0].mxu0 %v342
        %v442 = vpop.f32.mrb[0].mxu0
        %v443 = vadd.f32 0.0, %v442
        %v444 = vpop.f32.mrb[0].mxu0
        %v445 = vpop.f32.mrb[0].mxu0
        %v446 = vpop.f32.mrb[0].mxu0
        %447 = vdwg.mxu0
        %s448 = smul.u32 %s335, 128
        %s449 = sshra.s32 %s448, 7
        %s450 = sand.u32 %s448, 127
        %s451 = smul.addr %s449, 8
        %s452 = scalar_lea.vmem [#allocation2], %s451
        %v453 = vld [vmem:[%s452] sm:$0xff]
        %v454 = vadd.f32 %v453, %v443
        %455 = vst [vmem:[%s452] sm:$0xff] %v454
        %s456 = sadd.s32 %s213, 2
        %s457 = sld [smem:[#allocation4 + %s456]]
        %s458 = sld [smem:[#allocation5 + %s456]]
        %s459 = smul.u32 %s458, 128
        %s460 = sshra.s32 %s459, 7
        %s461 = sand.u32 %s459, 127
        %s462 = smul.addr %s460, 4
        %s463 = scalar_lea.vmem [#allocation6], %s462
        %v464 = vld [vmem:[%s463] sm:$0xf]
        %s465 = scalar_lea.vmem %s183, 128 [#allocation9]
        %v466 = vld [vmem:[%s465] sm:$0xf]
        %v467 = vld [vmem:[%s465 + $0x4] sm:$0xf]
        %v468 = vld [vmem:[%s465 + $0x8] sm:$0xf]
        %v469 = vld [vmem:[%s465 + $0xc] sm:$0xf]
        %v470 = vld [vmem:[%s465 + $0x10] sm:$0xf]
        %v471 = vld [vmem:[%s465 + $0x14] sm:$0xf]
        %v472 = vld [vmem:[%s465 + $0x18] sm:$0xf]
        %v473 = vld [vmem:[%s465 + $0x1c] sm:$0xf]
        %v474 = vld [vmem:[%s465 + $0x20] sm:$0xf]
        %v475 = vld [vmem:[%s465 + $0x24] sm:$0xf]
        %v476 = vld [vmem:[%s465 + $0x28] sm:$0xf]
        %v477 = vld [vmem:[%s465 + $0x2c] sm:$0xf]
        %v478 = vld [vmem:[%s465 + $0x30] sm:$0xf]
        %v479 = vld [vmem:[%s465 + $0x34] sm:$0xf]
        %v480 = vld [vmem:[%s465 + $0x38] sm:$0xf]
        %v481 = vld [vmem:[%s465 + $0x3c] sm:$0xf]
        %v498 = vunpack.c.l.b16 %v466
        %v499 = vunpack.c.l.b16 %v467
        %v500 = vunpack.c.l.b16 %v468
        %v501 = vunpack.c.l.b16 %v469
        %v502 = vunpack.c.l.b16 %v470
        %v503 = vunpack.c.l.b16 %v471
        %v504 = vunpack.c.l.b16 %v472
        %v505 = vunpack.c.l.b16 %v473
        %v506 = vunpack.c.l.b16 %v474
        %v507 = vunpack.c.l.b16 %v475
        %v508 = vunpack.c.l.b16 %v476
        %v509 = vunpack.c.l.b16 %v477
        %v510 = vunpack.c.l.b16 %v478
        %v511 = vunpack.c.l.b16 %v479
        %v512 = vunpack.c.l.b16 %v480
        %v513 = vunpack.c.l.b16 %v481
        %v514 = vpack.c.b16 %v499, %v498
        %v515 = vpack.c.b16 %v501, %v500
        %v516 = vpack.c.b16 %v503, %v502
        %v517 = vpack.c.b16 %v505, %v504
        %v518 = vpack.c.b16 %v507, %v506
        %v519 = vpack.c.b16 %v509, %v508
        %v520 = vpack.c.b16 %v511, %v510
        %v521 = vpack.c.b16 %v513, %v512
        %530 = vmatprep.subr.bf16.mxu0 0
        %531 = vmatpush1.bf16.msra.mxu0 %v514
        %532 = vmatprep.subr.bf16.mxu0 0
        %533 = vmatpush1.bf16.msra.mxu0 %v515
        %534 = vmatprep.subr.bf16.mxu0 0
        %535 = vmatpush1.bf16.msra.mxu0 %v516
        %536 = vmatprep.subr.bf16.mxu0 0
        %537 = vmatpush1.bf16.msra.mxu0 %v517
        %538 = vmatprep.subr.bf16.mxu0 0
        %539 = vmatpush1.bf16.msra.mxu0 %v518
        %540 = vmatprep.subr.bf16.mxu0 0
        %541 = vmatpush1.bf16.msra.mxu0 %v519
        %542 = vmatprep.subr.bf16.mxu0 0
        %543 = vmatpush1.bf16.msra.mxu0 %v520
        %544 = vmatprep.subr.bf16.mxu0 0
        %545 = vmatpush1.bf16.msra.mxu0 %v521
        %546 = vmatprep.subr.bf16.mxu0 0
        %547 = vmatpush1.bf16.msra.mxu0 0
        %548 = vmatprep.subr.bf16.mxu0 0
        %549 = vmatpush1.bf16.msra.mxu0 0
        %550 = vmatprep.subr.bf16.mxu0 0
        %551 = vmatpush1.bf16.msra.mxu0 0
        %552 = vmatprep.subr.bf16.mxu0 0
        %553 = vmatpush1.bf16.msra.mxu0 0
        %554 = vmatprep.subr.bf16.mxu0 0
        %555 = vmatpush1.bf16.msra.mxu0 0
        %556 = vmatprep.subr.bf16.mxu0 0
        %557 = vmatpush1.bf16.msra.mxu0 0
        %558 = vmatprep.subr.bf16.mxu0 0
        %559 = vmatpush1.bf16.msra.mxu0 0
        %560 = vmatprep.subr.bf16.mxu0 0
        %561 = vmatpush1.bf16.msra.mxu0 0
        %562 = vmatprep.mubr.bf16.mxu0 0
        %563 = vmatmul.mubr.bf16.gmra.mrb[0].mxu0 %v464
        %v564 = vpop.f32.mrb[0].mxu0
        %v565 = vadd.f32 0.0, %v564
        %v566 = vpop.f32.mrb[0].mxu0
        %v567 = vpop.f32.mrb[0].mxu0
        %v568 = vpop.f32.mrb[0].mxu0
        %569 = vdwg.mxu0
        %s570 = smul.u32 %s457, 128
        %s571 = sshra.s32 %s570, 7
        %s572 = sand.u32 %s570, 127
        %s573 = smul.addr %s571, 8
        %s574 = scalar_lea.vmem [#allocation2], %s573
        %v575 = vld [vmem:[%s574] sm:$0xff]
        %v576 = vadd.f32 %v575, %v565
        %577 = vst [vmem:[%s574] sm:$0xff] %v576
        %s578 = sadd.s32 %s213, 3
        %s579 = sld [smem:[#allocation4 + %s578]]
        %s580 = sld [smem:[#allocation5 + %s578]]
        %s581 = smul.u32 %s580, 128
        %s582 = sshra.s32 %s581, 7
        %s583 = sand.u32 %s581, 127
        %s584 = smul.addr %s582, 4
        %s585 = scalar_lea.vmem [#allocation6], %s584
        %v586 = vld [vmem:[%s585] sm:$0xf]
        %s587 = scalar_lea.vmem %s183, 192 [#allocation9]
        %v588 = vld [vmem:[%s587] sm:$0xf]
        %v589 = vld [vmem:[%s587 + $0x4] sm:$0xf]
        %v590 = vld [vmem:[%s587 + $0x8] sm:$0xf]
        %v591 = vld [vmem:[%s587 + $0xc] sm:$0xf]
        %v592 = vld [vmem:[%s587 + $0x10] sm:$0xf]
        %v593 = vld [vmem:[%s587 + $0x14] sm:$0xf]
        %v594 = vld [vmem:[%s587 + $0x18] sm:$0xf]
        %v595 = vld [vmem:[%s587 + $0x1c] sm:$0xf]
        %v596 = vld [vmem:[%s587 + $0x20] sm:$0xf]
        %v597 = vld [vmem:[%s587 + $0x24] sm:$0xf]
        %v598 = vld [vmem:[%s587 + $0x28] sm:$0xf]
        %v599 = vld [vmem:[%s587 + $0x2c] sm:$0xf]
        %v600 = vld [vmem:[%s587 + $0x30] sm:$0xf]
        %v601 = vld [vmem:[%s587 + $0x34] sm:$0xf]
        %v602 = vld [vmem:[%s587 + $0x38] sm:$0xf]
        %v603 = vld [vmem:[%s587 + $0x3c] sm:$0xf]
        %v620 = vunpack.c.l.b16 %v588
        %v621 = vunpack.c.l.b16 %v589
        %v622 = vunpack.c.l.b16 %v590
        %v623 = vunpack.c.l.b16 %v591
        %v624 = vunpack.c.l.b16 %v592
        %v625 = vunpack.c.l.b16 %v593
        %v626 = vunpack.c.l.b16 %v594
        %v627 = vunpack.c.l.b16 %v595
        %v628 = vunpack.c.l.b16 %v596
        %v629 = vunpack.c.l.b16 %v597
        %v630 = vunpack.c.l.b16 %v598
        %v631 = vunpack.c.l.b16 %v599
        %v632 = vunpack.c.l.b16 %v600
        %v633 = vunpack.c.l.b16 %v601
        %v634 = vunpack.c.l.b16 %v602
        %v635 = vunpack.c.l.b16 %v603
        %v636 = vpack.c.b16 %v621, %v620
        %v637 = vpack.c.b16 %v623, %v622
        %v638 = vpack.c.b16 %v625, %v624
        %v639 = vpack.c.b16 %v627, %v626
        %v640 = vpack.c.b16 %v629, %v628
        %v641 = vpack.c.b16 %v631, %v630
        %v642 = vpack.c.b16 %v633, %v632
        %v643 = vpack.c.b16 %v635, %v634
        %652 = vmatprep.subr.bf16.mxu0 0
        %653 = vmatpush1.bf16.msra.mxu0 %v636
        %654 = vmatprep.subr.bf16.mxu0 0
        %655 = vmatpush1.bf16.msra.mxu0 %v637
        %656 = vmatprep.subr.bf16.mxu0 0
        %657 = vmatpush1.bf16.msra.mxu0 %v638
        %658 = vmatprep.subr.bf16.mxu0 0
        %659 = vmatpush1.bf16.msra.mxu0 %v639
        %660 = vmatprep.subr.bf16.mxu0 0
        %661 = vmatpush1.bf16.msra.mxu0 %v640
        %662 = vmatprep.subr.bf16.mxu0 0
        %663 = vmatpush1.bf16.msra.mxu0 %v641
        %664 = vmatprep.subr.bf16.mxu0 0
        %665 = vmatpush1.bf16.msra.mxu0 %v642
        %666 = vmatprep.subr.bf16.mxu0 0
        %667 = vmatpush1.bf16.msra.mxu0 %v643
        %668 = vmatprep.subr.bf16.mxu0 0
        %669 = vmatpush1.bf16.msra.mxu0 0
        %670 = vmatprep.subr.bf16.mxu0 0
        %671 = vmatpush1.bf16.msra.mxu0 0
        %672 = vmatprep.subr.bf16.mxu0 0
        %673 = vmatpush1.bf16.msra.mxu0 0
        %674 = vmatprep.subr.bf16.mxu0 0
        %675 = vmatpush1.bf16.msra.mxu0 0
        %676 = vmatprep.subr.bf16.mxu0 0
        %677 = vmatpush1.bf16.msra.mxu0 0
        %678 = vmatprep.subr.bf16.mxu0 0
        %679 = vmatpush1.bf16.msra.mxu0 0
        %680 = vmatprep.subr.bf16.mxu0 0
        %681 = vmatpush1.bf16.msra.mxu0 0
        %682 = vmatprep.subr.bf16.mxu0 0
        %683 = vmatpush1.bf16.msra.mxu0 0
        %684 = vmatprep.mubr.bf16.mxu0 0
        %685 = vmatmul.mubr.bf16.gmra.mrb[0].mxu0 %v586
        %v686 = vpop.f32.mrb[0].mxu0
        %v687 = vadd.f32 0.0, %v686
        %v688 = vpop.f32.mrb[0].mxu0
        %v689 = vpop.f32.mrb[0].mxu0
        %v690 = vpop.f32.mrb[0].mxu0
        %691 = vdwg.mxu0
        %s692 = smul.u32 %s579, 128
        %s693 = sshra.s32 %s692, 7
        %s694 = sand.u32 %s692, 127
        %s695 = smul.addr %s693, 8
        %s696 = scalar_lea.vmem [#allocation2], %s695
        %v697 = vld [vmem:[%s696] sm:$0xff]
        %v698 = vadd.f32 %v697, %v687
        %699 = vst [vmem:[%s696] sm:$0xff] %v698
        %s700 = sadd.s32 %s213, 4
        %s701 = sld [smem:[#allocation4 + %s700]]
        %s702 = sld [smem:[#allocation5 + %s700]]
        %s703 = smul.u32 %s702, 128
        %s704 = sshra.s32 %s703, 7
        %s705 = sand.u32 %s703, 127
        %s706 = smul.addr %s704, 4
        %s707 = scalar_lea.vmem [#allocation6], %s706
        %v708 = vld [vmem:[%s707] sm:$0xf]
        %s709 = scalar_lea.vmem %s183, 256 [#allocation9]
        %v710 = vld [vmem:[%s709] sm:$0xf]
        %v711 = vld [vmem:[%s709 + $0x4] sm:$0xf]
        %v712 = vld [vmem:[%s709 + $0x8] sm:$0xf]
        %v713 = vld [vmem:[%s709 + $0xc] sm:$0xf]
        %v714 = vld [vmem:[%s709 + $0x10] sm:$0xf]
        %v715 = vld [vmem:[%s709 + $0x14] sm:$0xf]
        %v716 = vld [vmem:[%s709 + $0x18] sm:$0xf]
        %v717 = vld [vmem:[%s709 + $0x1c] sm:$0xf]
        %v718 = vld [vmem:[%s709 + $0x20] sm:$0xf]
        %v719 = vld [vmem:[%s709 + $0x24] sm:$0xf]
        %v720 = vld [vmem:[%s709 + $0x28] sm:$0xf]
        %v721 = vld [vmem:[%s709 + $0x2c] sm:$0xf]
        %v722 = vld [vmem:[%s709 + $0x30] sm:$0xf]
        %v723 = vld [vmem:[%s709 + $0x34] sm:$0xf]
        %v724 = vld [vmem:[%s709 + $0x38] sm:$0xf]
        %v725 = vld [vmem:[%s709 + $0x3c] sm:$0xf]
        %v742 = vunpack.c.l.b16 %v710
        %v743 = vunpack.c.l.b16 %v711
        %v744 = vunpack.c.l.b16 %v712
        %v745 = vunpack.c.l.b16 %v713
        %v746 = vunpack.c.l.b16 %v714
        %v747 = vunpack.c.l.b16 %v715
        %v748 = vunpack.c.l.b16 %v716
        %v749 = vunpack.c.l.b16 %v717
        %v750 = vunpack.c.l.b16 %v718
        %v751 = vunpack.c.l.b16 %v719
        %v752 = vunpack.c.l.b16 %v720
        %v753 = vunpack.c.l.b16 %v721
        %v754 = vunpack.c.l.b16 %v722
        %v755 = vunpack.c.l.b16 %v723
        %v756 = vunpack.c.l.b16 %v724
        %v757 = vunpack.c.l.b16 %v725
        %v758 = vpack.c.b16 %v743, %v742
        %v759 = vpack.c.b16 %v745, %v744
        %v760 = vpack.c.b16 %v747, %v746
        %v761 = vpack.c.b16 %v749, %v748
        %v762 = vpack.c.b16 %v751, %v750
        %v763 = vpack.c.b16 %v753, %v752
        %v764 = vpack.c.b16 %v755, %v754
        %v765 = vpack.c.b16 %v757, %v756
        %774 = vmatprep.subr.bf16.mxu0 0
        %775 = vmatpush1.bf16.msra.mxu0 %v758
        %776 = vmatprep.subr.bf16.mxu0 0
        %777 = vmatpush1.bf16.msra.mxu0 %v759
        %778 = vmatprep.subr.bf16.mxu0 0
        %779 = vmatpush1.bf16.msra.mxu0 %v760
        %780 = vmatprep.subr.bf16.mxu0 0
        %781 = vmatpush1.bf16.msra.mxu0 %v761
        %782 = vmatprep.subr.bf16.mxu0 0
        %783 = vmatpush1.bf16.msra.mxu0 %v762
        %784 = vmatprep.subr.bf16.mxu0 0
        %785 = vmatpush1.bf16.msra.mxu0 %v763
        %786 = vmatprep.subr.bf16.mxu0 0
        %787 = vmatpush1.bf16.msra.mxu0 %v764
        %788 = vmatprep.subr.bf16.mxu0 0
        %789 = vmatpush1.bf16.msra.mxu0 %v765
        %790 = vmatprep.subr.bf16.mxu0 0
        %791 = vmatpush1.bf16.msra.mxu0 0
        %792 = vmatprep.subr.bf16.mxu0 0
        %793 = vmatpush1.bf16.msra.mxu0 0
        %794 = vmatprep.subr.bf16.mxu0 0
        %795 = vmatpush1.bf16.msra.mxu0 0
        %796 = vmatprep.subr.bf16.mxu0 0
        %797 = vmatpush1.bf16.msra.mxu0 0
        %798 = vmatprep.subr.bf16.mxu0 0
        %799 = vmatpush1.bf16.msra.mxu0 0
        %800 = vmatprep.subr.bf16.mxu0 0
        %801 = vmatpush1.bf16.msra.mxu0 0
        %802 = vmatprep.subr.bf16.mxu0 0
        %803 = vmatpush1.bf16.msra.mxu0 0
        %804 = vmatprep.subr.bf16.mxu0 0
        %805 = vmatpush1.bf16.msra.mxu0 0
        %806 = vmatprep.mubr.bf16.mxu0 0
        %807 = vmatmul.mubr.bf16.gmra.mrb[0].mxu0 %v708
        %v808 = vpop.f32.mrb[0].mxu0
        %v809 = vadd.f32 0.0, %v808
        %v810 = vpop.f32.mrb[0].mxu0
        %v811 = vpop.f32.mrb[0].mxu0
        %v812 = vpop.f32.mrb[0].mxu0
        %813 = vdwg.mxu0
        %s814 = smul.u32 %s701, 128
        %s815 = sshra.s32 %s814, 7
        %s816 = sand.u32 %s814, 127
        %s817 = smul.addr %s815, 8
        %s818 = scalar_lea.vmem [#allocation2], %s817
        %v819 = vld [vmem:[%s818] sm:$0xff]
        %v820 = vadd.f32 %v819, %v809
        %821 = vst [vmem:[%s818] sm:$0xff] %v820
        %s822 = sadd.s32 %s213, 5
        %s823 = sld [smem:[#allocation4 + %s822]]
        %s824 = sld [smem:[#allocation5 + %s822]]
        %s825 = smul.u32 %s824, 128
        %s826 = sshra.s32 %s825, 7
        %s827 = sand.u32 %s825, 127
        %s828 = smul.addr %s826, 4
        %s829 = scalar_lea.vmem [#allocation6], %s828
        %v830 = vld [vmem:[%s829] sm:$0xf]
        %s831 = scalar_lea.vmem %s183, 320 [#allocation9]
        %v832 = vld [vmem:[%s831] sm:$0xf]
        %v833 = vld [vmem:[%s831 + $0x4] sm:$0xf]
        %v834 = vld [vmem:[%s831 + $0x8] sm:$0xf]
        %v835 = vld [vmem:[%s831 + $0xc] sm:$0xf]
        %v836 = vld [vmem:[%s831 + $0x10] sm:$0xf]
        %v837 = vld [vmem:[%s831 + $0x14] sm:$0xf]
        %v838 = vld [vmem:[%s831 + $0x18] sm:$0xf]
        %v839 = vld [vmem:[%s831 + $0x1c] sm:$0xf]
        %v840 = vld [vmem:[%s831 + $0x20] sm:$0xf]
        %v841 = vld [vmem:[%s831 + $0x24] sm:$0xf]
        %v842 = vld [vmem:[%s831 + $0x28] sm:$0xf]
        %v843 = vld [vmem:[%s831 + $0x2c] sm:$0xf]
        %v844 = vld [vmem:[%s831 + $0x30] sm:$0xf]
        %v845 = vld [vmem:[%s831 + $0x34] sm:$0xf]
        %v846 = vld [vmem:[%s831 + $0x38] sm:$0xf]
        %v847 = vld [vmem:[%s831 + $0x3c] sm:$0xf]
        %v864 = vunpack.c.l.b16 %v832
        %v865 = vunpack.c.l.b16 %v833
        %v866 = vunpack.c.l.b16 %v834
        %v867 = vunpack.c.l.b16 %v835
        %v868 = vunpack.c.l.b16 %v836
        %v869 = vunpack.c.l.b16 %v837
        %v870 = vunpack.c.l.b16 %v838
        %v871 = vunpack.c.l.b16 %v839
        %v872 = vunpack.c.l.b16 %v840
        %v873 = vunpack.c.l.b16 %v841
        %v874 = vunpack.c.l.b16 %v842
        %v875 = vunpack.c.l.b16 %v843
        %v876 = vunpack.c.l.b16 %v844
        %v877 = vunpack.c.l.b16 %v845
        %v878 = vunpack.c.l.b16 %v846
        %v879 = vunpack.c.l.b16 %v847
        %v880 = vpack.c.b16 %v865, %v864
        %v881 = vpack.c.b16 %v867, %v866
        %v882 = vpack.c.b16 %v869, %v868
        %v883 = vpack.c.b16 %v871, %v870
        %v884 = vpack.c.b16 %v873, %v872
        %v885 = vpack.c.b16 %v875, %v874
        %v886 = vpack.c.b16 %v877, %v876
        %v887 = vpack.c.b16 %v879, %v878
        %896 = vmatprep.subr.bf16.mxu0 0
        %897 = vmatpush1.bf16.msra.mxu0 %v880
        %898 = vmatprep.subr.bf16.mxu0 0
        %899 = vmatpush1.bf16.msra.mxu0 %v881
        %900 = vmatprep.subr.bf16.mxu0 0
        %901 = vmatpush1.bf16.msra.mxu0 %v882
        %902 = vmatprep.subr.bf16.mxu0 0
        %903 = vmatpush1.bf16.msra.mxu0 %v883
        %904 = vmatprep.subr.bf16.mxu0 0
        %905 = vmatpush1.bf16.msra.mxu0 %v884
        %906 = vmatprep.subr.bf16.mxu0 0
        %907 = vmatpush1.bf16.msra.mxu0 %v885
        %908 = vmatprep.subr.bf16.mxu0 0
        %909 = vmatpush1.bf16.msra.mxu0 %v886
        %910 = vmatprep.subr.bf16.mxu0 0
        %911 = vmatpush1.bf16.msra.mxu0 %v887
        %912 = vmatprep.subr.bf16.mxu0 0
        %913 = vmatpush1.bf16.msra.mxu0 0
        %914 = vmatprep.subr.bf16.mxu0 0
        %915 = vmatpush1.bf16.msra.mxu0 0
        %916 = vmatprep.subr.bf16.mxu0 0
        %917 = vmatpush1.bf16.msra.mxu0 0
        %918 = vmatprep.subr.bf16.mxu0 0
        %919 = vmatpush1.bf16.msra.mxu0 0
        %920 = vmatprep.subr.bf16.mxu0 0
        %921 = vmatpush1.bf16.msra.mxu0 0
        %922 = vmatprep.subr.bf16.mxu0 0
        %923 = vmatpush1.bf16.msra.mxu0 0
        %924 = vmatprep.subr.bf16.mxu0 0
        %925 = vmatpush1.bf16.msra.mxu0 0
        %926 = vmatprep.subr.bf16.mxu0 0
        %927 = vmatpush1.bf16.msra.mxu0 0
        %928 = vmatprep.mubr.bf16.mxu0 0
        %929 = vmatmul.mubr.bf16.gmra.mrb[0].mxu0 %v830
        %v930 = vpop.f32.mrb[0].mxu0
        %v931 = vadd.f32 0.0, %v930
        %v932 = vpop.f32.mrb[0].mxu0
        %v933 = vpop.f32.mrb[0].mxu0
        %v934 = vpop.f32.mrb[0].mxu0
        %935 = vdwg.mxu0
        %s936 = smul.u32 %s823, 128
        %s937 = sshra.s32 %s936, 7
        %s938 = sand.u32 %s936, 127
        %s939 = smul.addr %s937, 8
        %s940 = scalar_lea.vmem [#allocation2], %s939
        %v941 = vld [vmem:[%s940] sm:$0xff]
        %v942 = vadd.f32 %v941, %v931
        %943 = vst [vmem:[%s940] sm:$0xff] %v942
        %s944 = sadd.s32 %s213, 6
        %s945 = sld [smem:[#allocation4 + %s944]]
        %s946 = sld [smem:[#allocation5 + %s944]]
        %s947 = smul.u32 %s946, 128
        %s948 = sshra.s32 %s947, 7
        %s949 = sand.u32 %s947, 127
        %s950 = smul.addr %s948, 4
        %s951 = scalar_lea.vmem [#allocation6], %s950
        %v952 = vld [vmem:[%s951] sm:$0xf]
        %s953 = scalar_lea.vmem %s183, 384 [#allocation9]
        %v954 = vld [vmem:[%s953] sm:$0xf]
        %v955 = vld [vmem:[%s953 + $0x4] sm:$0xf]
        %v956 = vld [vmem:[%s953 + $0x8] sm:$0xf]
        %v957 = vld [vmem:[%s953 + $0xc] sm:$0xf]
        %v958 = vld [vmem:[%s953 + $0x10] sm:$0xf]
        %v959 = vld [vmem:[%s953 + $0x14] sm:$0xf]
        %v960 = vld [vmem:[%s953 + $0x18] sm:$0xf]
        %v961 = vld [vmem:[%s953 + $0x1c] sm:$0xf]
        %v962 = vld [vmem:[%s953 + $0x20] sm:$0xf]
        %v963 = vld [vmem:[%s953 + $0x24] sm:$0xf]
        %v964 = vld [vmem:[%s953 + $0x28] sm:$0xf]
        %v965 = vld [vmem:[%s953 + $0x2c] sm:$0xf]
        %v966 = vld [vmem:[%s953 + $0x30] sm:$0xf]
        %v967 = vld [vmem:[%s953 + $0x34] sm:$0xf]
        %v968 = vld [vmem:[%s953 + $0x38] sm:$0xf]
        %v969 = vld [vmem:[%s953 + $0x3c] sm:$0xf]
        %v986 = vunpack.c.l.b16 %v954
        %v987 = vunpack.c.l.b16 %v955
        %v988 = vunpack.c.l.b16 %v956
        %v989 = vunpack.c.l.b16 %v957
        %v990 = vunpack.c.l.b16 %v958
        %v991 = vunpack.c.l.b16 %v959
        %v992 = vunpack.c.l.b16 %v960
        %v993 = vunpack.c.l.b16 %v961
        %v994 = vunpack.c.l.b16 %v962
        %v995 = vunpack.c.l.b16 %v963
        %v996 = vunpack.c.l.b16 %v964
        %v997 = vunpack.c.l.b16 %v965
        %v998 = vunpack.c.l.b16 %v966
        %v999 = vunpack.c.l.b16 %v967
        %v1000 = vunpack.c.l.b16 %v968
        %v1001 = vunpack.c.l.b16 %v969
        %v1002 = vpack.c.b16 %v987, %v986
        %v1003 = vpack.c.b16 %v989, %v988
        %v1004 = vpack.c.b16 %v991, %v990
        %v1005 = vpack.c.b16 %v993, %v992
        %v1006 = vpack.c.b16 %v995, %v994
        %v1007 = vpack.c.b16 %v997, %v996
        %v1008 = vpack.c.b16 %v999, %v998
        %v1009 = vpack.c.b16 %v1001, %v1000
        %1018 = vmatprep.subr.bf16.mxu0 0
        %1019 = vmatpush1.bf16.msra.mxu0 %v1002
        %1020 = vmatprep.subr.bf16.mxu0 0
        %1021 = vmatpush1.bf16.msra.mxu0 %v1003
        %1022 = vmatprep.subr.bf16.mxu0 0
        %1023 = vmatpush1.bf16.msra.mxu0 %v1004
        %1024 = vmatprep.subr.bf16.mxu0 0
        %1025 = vmatpush1.bf16.msra.mxu0 %v1005
        %1026 = vmatprep.subr.bf16.mxu0 0
        %1027 = vmatpush1.bf16.msra.mxu0 %v1006
        %1028 = vmatprep.subr.bf16.mxu0 0
        %1029 = vmatpush1.bf16.msra.mxu0 %v1007
        %1030 = vmatprep.subr.bf16.mxu0 0
        %1031 = vmatpush1.bf16.msra.mxu0 %v1008
        %1032 = vmatprep.subr.bf16.mxu0 0
        %1033 = vmatpush1.bf16.msra.mxu0 %v1009
        %1034 = vmatprep.subr.bf16.mxu0 0
        %1035 = vmatpush1.bf16.msra.mxu0 0
        %1036 = vmatprep.subr.bf16.mxu0 0
        %1037 = vmatpush1.bf16.msra.mxu0 0
        %1038 = vmatprep.subr.bf16.mxu0 0
        %1039 = vmatpush1.bf16.msra.mxu0 0
        %1040 = vmatprep.subr.bf16.mxu0 0
        %1041 = vmatpush1.bf16.msra.mxu0 0
        %1042 = vmatprep.subr.bf16.mxu0 0
        %1043 = vmatpush1.bf16.msra.mxu0 0
        %1044 = vmatprep.subr.bf16.mxu0 0
        %1045 = vmatpush1.bf16.msra.mxu0 0
        %1046 = vmatprep.subr.bf16.mxu0 0
        %1047 = vmatpush1.bf16.msra.mxu0 0
        %1048 = vmatprep.subr.bf16.mxu0 0
        %1049 = vmatpush1.bf16.msra.mxu0 0
        %1050 = vmatprep.mubr.bf16.mxu0 0
        %1051 = vmatmul.mubr.bf16.gmra.mrb[0].mxu0 %v952
        %v1052 = vpop.f32.mrb[0].mxu0
        %v1053 = vadd.f32 0.0, %v1052
        %v1054 = vpop.f32.mrb[0].mxu0
        %v1055 = vpop.f32.mrb[0].mxu0
        %v1056 = vpop.f32.mrb[0].mxu0
        %1057 = vdwg.mxu0
        %s1058 = smul.u32 %s945, 128
        %s1059 = sshra.s32 %s1058, 7
        %s1060 = sand.u32 %s1058, 127
        %s1061 = smul.addr %s1059, 8
        %s1062 = scalar_lea.vmem [#allocation2], %s1061
        %v1063 = vld [vmem:[%s1062] sm:$0xff]
        %v1064 = vadd.f32 %v1063, %v1053
        %1065 = vst [vmem:[%s1062] sm:$0xff] %v1064
        %s1066 = sadd.s32 %s213, 7
        %s1067 = sld [smem:[#allocation4 + %s1066]]
        %s1068 = sld [smem:[#allocation5 + %s1066]]
        %s1069 = smul.u32 %s1068, 128
        %s1070 = sshra.s32 %s1069, 7
        %s1071 = sand.u32 %s1069, 127
        %s1072 = smul.addr %s1070, 4
        %s1073 = scalar_lea.vmem [#allocation6], %s1072
        %v1074 = vld [vmem:[%s1073] sm:$0xf]
        %s1075 = scalar_lea.vmem %s183, 448 [#allocation9]
        %v1076 = vld [vmem:[%s1075] sm:$0xf]
        %v1077 = vld [vmem:[%s1075 + $0x4] sm:$0xf]
        %v1078 = vld [vmem:[%s1075 + $0x8] sm:$0xf]
        %v1079 = vld [vmem:[%s1075 + $0xc] sm:$0xf]
        %v1080 = vld [vmem:[%s1075 + $0x10] sm:$0xf]
        %v1081 = vld [vmem:[%s1075 + $0x14] sm:$0xf]
        %v1082 = vld [vmem:[%s1075 + $0x18] sm:$0xf]
        %v1083 = vld [vmem:[%s1075 + $0x1c] sm:$0xf]
        %v1084 = vld [vmem:[%s1075 + $0x20] sm:$0xf]
        %v1085 = vld [vmem:[%s1075 + $0x24] sm:$0xf]
        %v1086 = vld [vmem:[%s1075 + $0x28] sm:$0xf]
        %v1087 = vld [vmem:[%s1075 + $0x2c] sm:$0xf]
        %v1088 = vld [vmem:[%s1075 + $0x30] sm:$0xf]
        %v1089 = vld [vmem:[%s1075 + $0x34] sm:$0xf]
        %v1090 = vld [vmem:[%s1075 + $0x38] sm:$0xf]
        %v1091 = vld [vmem:[%s1075 + $0x3c] sm:$0xf]
        %v1108 = vunpack.c.l.b16 %v1076
        %v1109 = vunpack.c.l.b16 %v1077
        %v1110 = vunpack.c.l.b16 %v1078
        %v1111 = vunpack.c.l.b16 %v1079
        %v1112 = vunpack.c.l.b16 %v1080
        %v1113 = vunpack.c.l.b16 %v1081
        %v1114 = vunpack.c.l.b16 %v1082
        %v1115 = vunpack.c.l.b16 %v1083
        %v1116 = vunpack.c.l.b16 %v1084
        %v1117 = vunpack.c.l.b16 %v1085
        %v1118 = vunpack.c.l.b16 %v1086
        %v1119 = vunpack.c.l.b16 %v1087
        %v1120 = vunpack.c.l.b16 %v1088
        %v1121 = vunpack.c.l.b16 %v1089
        %v1122 = vunpack.c.l.b16 %v1090
        %v1123 = vunpack.c.l.b16 %v1091
        %v1124 = vpack.c.b16 %v1109, %v1108
        %v1125 = vpack.c.b16 %v1111, %v1110
        %v1126 = vpack.c.b16 %v1113, %v1112
        %v1127 = vpack.c.b16 %v1115, %v1114
        %v1128 = vpack.c.b16 %v1117, %v1116
        %v1129 = vpack.c.b16 %v1119, %v1118
        %v1130 = vpack.c.b16 %v1121, %v1120
        %v1131 = vpack.c.b16 %v1123, %v1122
        %1140 = vmatprep.subr.bf16.mxu0 0
        %1141 = vmatpush1.bf16.msra.mxu0 %v1124
        %1142 = vmatprep.subr.bf16.mxu0 0
        %1143 = vmatpush1.bf16.msra.mxu0 %v1125
        %1144 = vmatprep.subr.bf16.mxu0 0
        %1145 = vmatpush1.bf16.msra.mxu0 %v1126
        %1146 = vmatprep.subr.bf16.mxu0 0
        %1147 = vmatpush1.bf16.msra.mxu0 %v1127
        %1148 = vmatprep.subr.bf16.mxu0 0
        %1149 = vmatpush1.bf16.msra.mxu0 %v1128
        %1150 = vmatprep.subr.bf16.mxu0 0
        %1151 = vmatpush1.bf16.msra.mxu0 %v1129
        %1152 = vmatprep.subr.bf16.mxu0 0
        %1153 = vmatpush1.bf16.msra.mxu0 %v1130
        %1154 = vmatprep.subr.bf16.mxu0 0
        %1155 = vmatpush1.bf16.msra.mxu0 %v1131
        %1156 = vmatprep.subr.bf16.mxu0 0
        %1157 = vmatpush1.bf16.msra.mxu0 0
        %1158 = vmatprep.subr.bf16.mxu0 0
        %1159 = vmatpush1.bf16.msra.mxu0 0
        %1160 = vmatprep.subr.bf16.mxu0 0
        %1161 = vmatpush1.bf16.msra.mxu0 0
        %1162 = vmatprep.subr.bf16.mxu0 0
        %1163 = vmatpush1.bf16.msra.mxu0 0
        %1164 = vmatprep.subr.bf16.mxu0 0
        %1165 = vmatpush1.bf16.msra.mxu0 0
        %1166 = vmatprep.subr.bf16.mxu0 0
        %1167 = vmatpush1.bf16.msra.mxu0 0
        %1168 = vmatprep.subr.bf16.mxu0 0
        %1169 = vmatpush1.bf16.msra.mxu0 0
        %1170 = vmatprep.subr.bf16.mxu0 0
        %1171 = vmatpush1.bf16.msra.mxu0 0
        %1172 = vmatprep.mubr.bf16.mxu0 0
        %1173 = vmatmul.mubr.bf16.gmra.mrb[0].mxu0 %v1074
        %v1174 = vpop.f32.mrb[0].mxu0
        %v1175 = vadd.f32 0.0, %v1174
        %v1176 = vpop.f32.mrb[0].mxu0
        %v1177 = vpop.f32.mrb[0].mxu0
        %v1178 = vpop.f32.mrb[0].mxu0
        %1179 = vdwg.mxu0
        %s1180 = smul.u32 %s1067, 128
        %s1181 = sshra.s32 %s1180, 7
        %s1182 = sand.u32 %s1180, 127
        %s1183 = smul.addr %s1181, 8
        %s1184 = scalar_lea.vmem [#allocation2], %s1183
        %v1185 = vld [vmem:[%s1184] sm:$0xff]
        %v1186 = vadd.f32 %v1185, %v1175
        %1187 = vst [vmem:[%s1184] sm:$0xff] %v1186
        %p1188 = scmp.eq.s32.totalorder %s29, 1
        // Predicated region
        $region45: #{tpu_custom_call.1} parent=31 // pred_check
          %p1189 = pneg %p1188
        $region46: #{tpu_custom_call.1} parent=31 // pred_check_branch
          %1191 = sbr.rel (%p1189) target = $region48
        $region47: #{tpu_custom_call.1} parent=31 // pred_region
          %v1192 = vld [vmem:[#allocation2] sm:$0xff]
          %v1193 = vld [vmem:[#allocation2 + $0x8] sm:$0xff]
          %v1194 = vld [vmem:[#allocation2 + $0x10] sm:$0xff]
          %v1195 = vld [vmem:[#allocation2 + $0x18] sm:$0xff]
          %v1196 = vld [vmem:[#allocation2 + $0x20] sm:$0xff]
          %v1197 = vld [vmem:[#allocation2 + $0x28] sm:$0xff]
          %v1198 = vld [vmem:[%s4] sm:$0x3f]
          %v1200 = vlaneseq
          %v1201 = vshrl.u32 %v1200, 7
          %v1202 = vsub.s32 0, %v1201
          %v1203 = vrot.slane %v1198, %v1202
          %v1204 = vlaneseq
          %v1205 = vshrl.u32 %v1204, 7
          %v1206 = vsub.s32 1, %v1205
          %v1207 = vrot.slane %v1198, %v1206
          %v1208 = vlaneseq
          %v1209 = vshrl.u32 %v1208, 7
          %v1210 = vsub.s32 2, %v1209
          %v1211 = vrot.slane %v1198, %v1210
          %v1212 = vlaneseq
          %v1213 = vshrl.u32 %v1212, 7
          %v1214 = vsub.s32 3, %v1213
          %v1215 = vrot.slane %v1198, %v1214
          %v1216 = vlaneseq
          %v1217 = vshrl.u32 %v1216, 7
          %v1218 = vsub.s32 4, %v1217
          %v1219 = vrot.slane %v1198, %v1218
          %v1220 = vlaneseq
          %v1221 = vshrl.u32 %v1220, 7
          %v1222 = vsub.s32 5, %v1221
          %v1223 = vrot.slane %v1198, %v1222
          %v1230 = vadd.f32 %v1192, %v1203
          %v1231 = vadd.f32 %v1193, %v1207
          %v1232 = vadd.f32 %v1194, %v1211
          %v1233 = vadd.f32 %v1195, %v1215
          %v1234 = vadd.f32 %v1196, %v1219
          %v1235 = vadd.f32 %v1197, %v1223
          %1236 = vst [vmem:[#allocation11] sm:$0xff] %v1230
          %1237 = vst [vmem:[#allocation11 + $0x8] sm:$0xff] %v1231
          %1238 = vst [vmem:[#allocation11 + $0x10] sm:$0xff] %v1232
          %1239 = vst [vmem:[#allocation11 + $0x18] sm:$0xff] %v1233
          %1240 = vst [vmem:[#allocation11 + $0x20] sm:$0xff] %v1234
          %1241 = vst [vmem:[#allocation11 + $0x28] sm:$0xff] %v1235
        $region48: #{tpu_custom_call.1} parent=31 // pred_fallthru
          _
        // Predicated region
        $region49: #{tpu_custom_call.1} parent=31 // pred_check
          %p1242 = pneg %p110
        $region50: #{tpu_custom_call.1} parent=31 // pred_check_branch
          %1244 = sbr.rel (%p1242) target = $region52
        $region51: #{tpu_custom_call.1} parent=31 // pred_region
          %s1246 = ssub.s32 768, 768
          %1247 = vsyncadd [#allocation8], %s1246
          %s1249 = sshll.u32 [#allocation11], 4
          %s1250 = int_to_ptr.vmem [resolvable:$true] %s1249
          %1252 = dma.vmem_to_hbm [thread:$0]  %s1250, 768, %s5, [#allocation8]
        $region52: #{tpu_custom_call.1} parent=31 // pred_fallthru
          _
        // Predicated region
        $region53: #{tpu_custom_call.1} parent=31 // pred_check
          %p1253 = pneg %p110
        $region54: #{tpu_custom_call.1} parent=31 // pred_check_branch
          %1255 = sbr.rel (%p1253) target = $region56
        $region55: #{tpu_custom_call.1} parent=31 // pred_region
          %1256 = dma.done [#allocation8], 768
        $region56: #{tpu_custom_call.1} parent=31 // pred_fallthru
          _
      $region32: #{tpu_custom_call.1} parent=5 // pred_fallthru
        _
      %p1257 = scmp.le.s32.totalorder 2, %s24
      // Predicated region
      $region57: #{tpu_custom_call.1} parent=5 // pred_check
        %p1258 = pneg %p1257
      $region58: #{tpu_custom_call.1} parent=5 // pred_check_branch
        %1260 = sbr.rel (%p1258) target = $region60
      $region59: #{tpu_custom_call.1} parent=5 // pred_region
        %s1261 = ssub.s32 %s24, 2
      $region60: #{tpu_custom_call.1} parent=5 // pred_fallthru
        _
    $region6: #{tpu_custom_call.1} parent=1 // loop_footer
      %s28 = sadd.s32 1, %s24
    $region7: #{tpu_custom_call.1} parent=1 // loop_footer_branch
      %23 = sbr.rel target = $region3
    $region8: #{tpu_custom_call.1} parent=1 // loop_exit
      _
    %1262 = vsyncpa [#allocation7], 1
    %s1263 = scalar_lea.sflag [#allocation7], 1
    %1264 = vsyncpa %s1263, 1
    %1265 = vsyncpa [#allocation10], 1
    %s1266 = scalar_lea.sflag [#allocation10], 1
    %1267 = vsyncpa %s1266, 1
    %1268 = vsyncpa [#allocation8], 1
    %s1269 = scalar_lea.sflag [#allocation8], 1
    %1270 = vsyncpa %s1269, 1

</llo_original>
